<compile_context>
chip_gen: v7x
topology: tpu7x:2x2x1
jax: 0.10.0
libtpu: 0.0.40
codegen_flags: <defaults>
</compile_context>

<pallas_src>
import math
from functools import partial, lru_cache

import jax
import jax.numpy as jnp
from jax.experimental import pallas as pl
from jax.experimental.pallas import tpu as pltpu

CH = 64
NUM_HEADS = 8
NEG_INF = -1e30


def _round_up(x, m):
    return (x + m - 1) // m * m


def _apply_act(r, act, slope):
    if act == "leaky":
        return jnp.where(r >= 0, r, r * slope)
    if act == "relu":
        return jnp.maximum(r, 0.0)
    return r


def _ln(x, g, b, eps=1e-5):
    mu = jnp.mean(x, axis=-1, keepdims=True)
    var = jnp.mean((x - mu) ** 2, axis=-1, keepdims=True)
    return (x - mu) * jax.lax.rsqrt(var + eps) * g + b


def _const_spec(shape):
    rank = len(shape)
    return pl.BlockSpec(tuple(shape), lambda i, _r=rank: (0,) * _r)


def _pick_tm(M):
    Mp = _round_up(M, 8)
    if Mp > 1024:
        tm = 512
        return tm, _round_up(M, tm)
    if Mp >= 16 and Mp % 16 == 0:
        return Mp // 2, Mp          # two grid steps (dual-TC friendly)
    return Mp, Mp


# --------------------------------------------------------------------------
# Fused chain-of-matmuls kernel  (linear / angular conv / DownSample / imnet)
# --------------------------------------------------------------------------
def _make_mm_chain_kernel(nl, has_bias, acts, slopes):
    def kernel(*refs):
        x_ref = refs[0]
        idx = 1
        ws, bs = [], []
        for i in range(nl):
            ws.append(refs[idx]); idx += 1
            if has_bias[i]:
                bs.append(refs[idx]); idx += 1
            else:
                bs.append(None)
        o_ref = refs[idx]
        h = x_ref[...]
        for i in range(nl):
            r = jnp.dot(h, ws[i][...], preferred_element_type=jnp.float32)
            if bs[i] is not None:
                r = r + bs[i][...]
            r = _apply_act(r, acts[i], slopes[i])
            h = r.astype(jnp.bfloat16) if i < nl - 1 else r
        o_ref[...] = h.astype(o_ref.dtype)
    return kernel


def mlp_chain(x2d, layers, acts, slopes, out_dtype=jnp.float32):
    """x2d:(M,K) -> chain of (matmul [+bias] [+act]); all layers in one kernel."""
    M, K = x2d.shape
    nl = len(layers)
    x2d = x2d.astype(jnp.bfloat16)
    tm, Mp = _pick_tm(M)
    if Mp != M:
        x2d = jnp.pad(x2d, ((0, Mp - M), (0, 0)))
    in_specs = [pl.BlockSpec((tm, K), lambda i: (i, 0))]
    args = [x2d]
    has_bias = []
    for (wt, bias) in layers:
        in_specs.append(_const_spec(wt.shape))
        args.append(wt.astype(jnp.bfloat16))
        if bias is not None:
            nout = wt.shape[1]
            in_specs.append(_const_spec((1, nout)))
            args.append(bias.reshape(1, nout).astype(jnp.float32))
            has_bias.append(True)
        else:
            has_bias.append(False)
    N = layers[-1][0].shape[1]
    kern = _make_mm_chain_kernel(nl, tuple(has_bias), tuple(acts), tuple(slopes))
    out = pl.pallas_call(
        kern,
        out_shape=jax.ShapeDtypeStruct((Mp, N), out_dtype),
        grid=(Mp // tm,),
        in_specs=in_specs,
        out_specs=pl.BlockSpec((tm, N), lambda i: (i, 0)),
        compiler_params=pltpu.CompilerParams(dimension_semantics=("parallel",)),
    )(*args)
    return out[:M] if Mp != M else out


# --------------------------------------------------------------------------
# Fused chain of 3x3 convs (channels-last), intermediate kept in VMEM scratch
# --------------------------------------------------------------------------
def _make_conv33_chain_kernel(nl, has_bias, acts, slopes, H, W):
    def kernel(*refs):
        x_ref = refs[0]
        idx = 1
        ws, bs = [], []
        for i in range(nl):
            ws.append(refs[idx]); idx += 1
            if has_bias[i]:
                bs.append(refs[idx]); idx += 1
            else:
                bs.append(None)
        o_ref = refs[idx]; idx += 1
        scr_ref = refs[idx] if nl > 1 else None
        bn = x_ref.shape[0]
        M = bn * H * W

        def conv_from(src_ref, w_ref):
            cin = src_ref.shape[-1]
            cout = w_ref.shape[-1]
            acc = jnp.zeros((M, cout), jnp.float32)
            for t in range(9):
                ky, kx = divmod(t, 3)
                win = src_ref[:, ky:ky + H, kx:kx + W, :]
                if cin == 1:
                    acc = acc + (win.reshape(M, 1).astype(jnp.float32)
                                 * w_ref[t].astype(jnp.float32))
                else:
                    acc = acc + jnp.dot(win.reshape(M, cin), w_ref[t],
                                        preferred_element_type=jnp.float32)
            return acc

        src = x_ref
        scr_zeroed = False
        for i in range(nl):
            r = conv_from(src, ws[i])
            if bs[i] is not None:
                r = r + bs[i][...]
            r = _apply_act(r, acts[i], slopes[i])
            cthis = ws[i].shape[-1]
            if i < nl - 1:
                if not scr_zeroed:
                    scr_ref[...] = jnp.zeros(scr_ref.shape, scr_ref.dtype)
                    scr_zeroed = True
                scr_ref[:, 1:1 + H, 1:1 + W, :] = r.reshape(bn, H, W, cthis).astype(scr_ref.dtype)
                src = scr_ref
            else:
                o_ref[...] = r.reshape(bn, H, W, cthis).astype(o_ref.dtype)
    return kernel


def conv33_chain(x_cl, layers, acts, slopes, out_dtype=jnp.float32):
    """x_cl:(B,N,H,W,Cin) channels-last; layers: [(w:(9,Cin,Cout), bias|None)]."""
    b, n, h, w, cin = x_cl.shape
    bn = b * n
    nl = len(layers)
    xp = jnp.pad(x_cl.reshape(bn, h, w, cin).astype(jnp.bfloat16),
                 ((0, 0), (1, 1), (1, 1), (0, 0)))
    bn_blk = bn // 2 if bn % 2 == 0 else bn
    in_specs = [pl.BlockSpec((bn_blk, h + 2, w + 2, cin), lambda i: (i, 0, 0, 0))]
    args = [xp]
    has_bias = []
    for (wt, bias) in layers:
        in_specs.append(_const_spec(wt.shape))
        args.append(wt.astype(jnp.bfloat16))
        if bias is not None:
            nout = wt.shape[-1]
            in_specs.append(_const_spec((1, nout)))
            args.append(bias.reshape(1, nout).astype(jnp.float32))
            has_bias.append(True)
        else:
            has_bias.append(False)
    cout = layers[-1][0].shape[-1]
    scratch = []
    if nl > 1:
        cmid = layers[0][0].shape[-1]
        scratch = [pltpu.VMEM((bn_blk, h + 2, w + 2, cmid), jnp.bfloat16)]
    kern = _make_conv33_chain_kernel(nl, tuple(has_bias), tuple(acts), tuple(slopes), h, w)
    out = pl.pallas_call(
        kern,
        out_shape=jax.ShapeDtypeStruct((bn, h, w, cout), out_dtype),
        grid=(bn // bn_blk,),
        in_specs=in_specs,
        out_specs=pl.BlockSpec((bn_blk, h, w, cout), lambda i: (i, 0, 0, 0)),
        scratch_shapes=scratch,
        compiler_params=pltpu.CompilerParams(dimension_semantics=("parallel",)),
    )(*args)
    return out.reshape(b, n, h, w, cout)


# --------------------------------------------------------------------------
# Fused  1x1 conv (+bias, leaky) -> 3x3 conv (+bias)  kernel (SA/Epi fuse)
# --------------------------------------------------------------------------
def _make_fuse11_33_kernel(H, W):
    def kernel(x_ref, w1_ref, b1_ref, w2_ref, b2_ref, o_ref, scr_ref):
        bn = x_ref.shape[0]
        cin = x_ref.shape[-1]
        cmid = w1_ref.shape[-1]
        cout = w2_ref.shape[-1]
        M = bn * H * W
        A = x_ref[...].reshape(M, cin)
        r = jnp.dot(A, w1_ref[...], preferred_element_type=jnp.float32) + b1_ref[...]
        r = jnp.where(r >= 0, r, r * 0.2)
        scr_ref[...] = jnp.zeros(scr_ref.shape, scr_ref.dtype)
        scr_ref[:, 1:1 + H, 1:1 + W, :] = r.reshape(bn, H, W, cmid).astype(scr_ref.dtype)
        acc = jnp.zeros((M, cout), jnp.float32)
        for t in range(9):
            ky, kx = divmod(t, 3)
            win = scr_ref[:, ky:ky + H, kx:kx + W, :].reshape(M, cmid)
            acc = acc + jnp.dot(win, w2_ref[t], preferred_element_type=jnp.float32)
        acc = acc + b2_ref[...]
        o_ref[...] = acc.reshape(bn, H, W, cout).astype(o_ref.dtype)
    return kernel


def fuse11_33(x_cl, w1, b1, w2, b2, out_dtype=jnp.float32):
    b, n, h, w, cin = x_cl.shape
    bn = b * n
    cmid = w1.shape[1]
    cout = w2.shape[-1]
    x2 = x_cl.reshape(bn, h, w, cin).astype(jnp.bfloat16)
    bn_blk = bn // 2 if bn % 2 == 0 else bn
    out = pl.pallas_call(
        _make_fuse11_33_kernel(h, w),
        out_shape=jax.ShapeDtypeStruct((bn, h, w, cout), out_dtype),
        grid=(bn // bn_blk,),
        in_specs=[pl.BlockSpec((bn_blk, h, w, cin), lambda i: (i, 0, 0, 0)),
                  _const_spec(w1.shape),
                  _const_spec((1, cmid)),
                  _const_spec(w2.shape),
                  _const_spec((1, cout))],
        out_specs=pl.BlockSpec((bn_blk, h, w, cout), lambda i: (i, 0, 0, 0)),
        scratch_shapes=[pltpu.VMEM((bn_blk, h + 2, w + 2, cmid), jnp.bfloat16)],
        compiler_params=pltpu.CompilerParams(dimension_semantics=("parallel",)),
    )(x2, w1.astype(jnp.bfloat16), b1.reshape(1, cmid).astype(jnp.float32),
      w2.astype(jnp.bfloat16), b2.reshape(1, cout).astype(jnp.float32))
    return out.reshape(b, n, h, w, cout)


# --------------------------------------------------------------------------
# Fused EPI conv kernel: (1,angRes,K) conv + leaky + 1x1 (E -> angRes*E) + leaky
# --------------------------------------------------------------------------
def _make_epi_conv_kernel(V, K, Wd):
    def kernel(x_ref, w1_ref, w2_ref, o_ref):
        bd = x_ref.shape[0]
        C = x_ref.shape[-1]
        E = w1_ref.shape[-1]
        M = bd * Wd
        acc = jnp.zeros((M, E), jnp.float32)
        for kv in range(V):
            for kx in range(K):
                win = x_ref[:, kv, kx:kx + Wd, :].reshape(M, C)
                acc = acc + jnp.dot(win, w1_ref[kv * K + kx],
                                    preferred_element_type=jnp.float32)
        acc = jnp.where(acc >= 0, acc, acc * 0.2).astype(jnp.bfloat16)
        r2 = jnp.dot(acc, w2_ref[...], preferred_element_type=jnp.float32)
        r2 = jnp.where(r2 >= 0, r2, r2 * 0.2)
        o_ref[...] = r2.reshape(bd, Wd, r2.shape[-1]).astype(o_ref.dtype)
    return kernel


def epi_conv_module_cl(fm6, w1, w2, angRes):
    """fm6: (b,u,v,h,w,c) channels-last -> (b, n, h, w, E) (torch EPiConv)."""
    bb, uu, vv, hh, ww, cc = fm6.shape
    E = w1.shape[-1]
    K = w1.shape[0] // angRes
    pad = angRes // 2
    x = fm6.transpose(0, 1, 3, 2, 4, 5).reshape(bb * uu * hh, vv, ww, cc).astype(jnp.bfloat16)
    x = jnp.pad(x, ((0, 0), (0, 0), (pad, pad), (0, 0)))
    BD = bb * uu * hh
    bd_blk = BD // 2 if BD % 2 == 0 else BD
    out = pl.pallas_call(
        _make_epi_conv_kernel(vv, K, ww),
        out_shape=jax.ShapeDtypeStruct((BD, ww, angRes * E), jnp.bfloat16),
        grid=(BD // bd_blk,),
        in_specs=[pl.BlockSpec((bd_blk, vv, ww + 2 * pad, cc), lambda i: (i, 0, 0, 0)),
                  _const_spec(w1.shape),
                  _const_spec(w2.shape)],
        out_specs=pl.BlockSpec((bd_blk, ww, angRes * E), lambda i: (i, 0, 0)),
        compiler_params=pltpu.CompilerParams(dimension_semantics=("parallel",)),
    )(x, w1.astype(jnp.bfloat16), w2.astype(jnp.bfloat16))
    # out channel index o = e*angRes + v  (torch reshape convention)
    out = out.reshape(bb, uu, hh, ww, E, angRes).transpose(0, 1, 5, 2, 3, 4)
    return out.reshape(bb, uu * angRes, hh, ww, E)


# --------------------------------------------------------------------------
# Fused transformer inner blocks (self-attn EpiXTrans / cross-attn SA_Epi)
# --------------------------------------------------------------------------
def _mha_heads(q_src, k_src, v_src, wq_ref, wk_ref, wv_ref, wo_ref, mask, Bt, L, heads):
    E = wo_ref.shape[2]
    hd = wq_ref.shape[2]
    qb = q_src.astype(jnp.bfloat16)
    kb = k_src.astype(jnp.bfloat16)
    vb = v_src.astype(jnp.bfloat16)
    attn = jnp.zeros((Bt * L, E), jnp.float32)
    for h in range(heads):
        q_h = jnp.dot(qb, wq_ref[h], preferred_element_type=jnp.float32).reshape(Bt, L, hd)
        k_h = jnp.dot(kb, wk_ref[h], preferred_element_type=jnp.float32).reshape(Bt, L, hd)
        v_h = jnp.dot(vb, wv_ref[h], preferred_element_type=jnp.float32).reshape(Bt, L, hd)
        s = jnp.einsum('bqd,bkd->bqk', q_h.astype(jnp.bfloat16), k_h.astype(jnp.bfloat16),
                       preferred_element_type=jnp.float32)
        if mask is not None:
            s = s + mask[None, :, :]
        s = s - jnp.max(s, axis=-1, keepdims=True)
        p = jnp.exp(s)
        denom = jnp.sum(p, axis=-1, keepdims=True)
        o_h = jnp.einsum('bqk,bkd->bqd', p.astype(jnp.bfloat16), v_h.astype(jnp.bfloat16),
                         preferred_element_type=jnp.float32)
        o_h = o_h * pl.reciprocal(denom, approx=True)
        attn = attn + jnp.dot(o_h.reshape(Bt * L, hd).astype(jnp.bfloat16), wo_ref[h],
                              preferred_element_type=jnp.float32)
    return attn


def _make_epix_kernel(heads):
    def kernel(tok_ref, lin_in_ref, ng_ref, nb_ref, wq_ref, wk_ref, wv_ref, wo_ref,
               fg_ref, fb_ref, w1_ref, w2_ref, lout_ref, mask_ref, o_ref):
        Bt, L, C = tok_ref.shape
        M = Bt * L
        x = tok_ref[...].reshape(M, C)
        tok = jnp.dot(x, lin_in_ref[...], preferred_element_type=jnp.float32)
        tokn = _ln(tok, ng_ref[...], nb_ref[...])
        attn = _mha_heads(tokn, tokn, tok, wq_ref, wk_ref, wv_ref, wo_ref,
                          mask_ref[...], Bt, L, heads)
        tok = tok + attn
        ffn = _ln(tok, fg_ref[...], fb_ref[...])
        h1 = jnp.maximum(jnp.dot(ffn.astype(jnp.bfloat16), w1_ref[...],
                                 preferred_element_type=jnp.float32), 0.0)
        h2 = jnp.dot(h1.astype(jnp.bfloat16), w2_ref[...], preferred_element_type=jnp.float32)
        tok = tok + h2
        out = jnp.dot(tok.astype(jnp.bfloat16), lout_ref[...], preferred_element_type=jnp.float32)
        o_ref[...] = out.reshape(Bt, L, C).astype(o_ref.dtype)
    return kernel


def _make_cross_kernel(heads):
    def kernel(sa_ref, epi_ref, sain_ref, epiin_ref, sg_ref, sb_ref, eg_ref, eb_ref,
               wq_ref, wk_ref, wv_ref, wo_ref, fg_ref, fb_ref, w1_ref, w2_ref,
               lout_ref, o_ref):
        Bt, L, C2 = sa_ref.shape
        M = Bt * L
        sa = jnp.dot(sa_ref[...].reshape(M, C2), sain_ref[...],
                     preferred_element_type=jnp.float32)
        ep = jnp.dot(epi_ref[...].reshape(M, C2), epiin_ref[...],
                     preferred_element_type=jnp.float32)
        sa_n = _ln(sa, sg_ref[...], sb_ref[...])
        ep_n = _ln(ep, eg_ref[...], eb_ref[...])
        attn = _mha_heads(ep_n, sa_n, sa, wq_ref, wk_ref, wv_ref, wo_ref, None, Bt, L, heads)
        sa = sa + attn
        ffn = _ln(sa, fg_ref[...], fb_ref[...])
        h1 = jnp.maximum(jnp.dot(ffn.astype(jnp.bfloat16), w1_ref[...],
                                 preferred_element_type=jnp.float32), 0.0)
        h2 = jnp.dot(h1.astype(jnp.bfloat16), w2_ref[...], preferred_element_type=jnp.float32)
        sa = sa + h2
        out = jnp.dot(sa.astype(jnp.bfloat16), lout_ref[...], preferred_element_type=jnp.float32)
        o_ref[...] = out.reshape(Bt, L, C2).astype(o_ref.dtype)
    return kernel


@lru_cache(maxsize=None)
def gen_mask(h, w, maxdisp=6):
    i = jnp.arange(h)
    j = jnp.arange(w)
    di = jnp.abs(i[:, None, None, None] - i[None, None, :, None])
    dj = jnp.abs(j[None, :, None, None] - j[None, None, None, :])
    allowed = (di * maxdisp) >= dj
    mask = jnp.where(allowed, 0.0, NEG_INF).astype(jnp.float32)
    return mask.reshape(h * w, h * w)


def epix_trans_inner_cl(buf6, p):
    # buf6: (b, U, V, H, W, c) fp32; tokens over (V, W), batch over (b, U, H)
    b, U, V, H, W, c = buf6.shape
    L = V * W
    Bt = b * U * H
    mask = gen_mask(V, W)
    tok = buf6.transpose(0, 1, 3, 2, 4, 5).reshape(Bt, L, c).astype(jnp.bfloat16)
    bt_blk = Bt // 2 if Bt % 2 == 0 else Bt
    E = p['lin_in'].shape[1]
    specs = [pl.BlockSpec((bt_blk, L, c), lambda i: (i, 0, 0)),
             _const_spec(p['lin_in'].shape),
             _const_spec((1, E)), _const_spec((1, E)),
             _const_spec(p['wq_h'].shape), _const_spec(p['wk_h'].shape),
             _const_spec(p['wv_h'].shape), _const_spec(p['wo_h'].shape),
             _const_spec((1, E)), _const_spec((1, E)),
             _const_spec(p['ff_w1'].shape), _const_spec(p['ff_w2'].shape),
             _const_spec(p['lin_out'].shape), _const_spec((L, L))]
    out = pl.pallas_call(
        _make_epix_kernel(NUM_HEADS),
        out_shape=jax.ShapeDtypeStruct((Bt, L, c), jnp.float32),
        grid=(Bt // bt_blk,),
        in_specs=specs,
        out_specs=pl.BlockSpec((bt_blk, L, c), lambda i: (i, 0, 0)),
        compiler_params=pltpu.CompilerParams(dimension_semantics=("parallel",)),
    )(tok, p['lin_in'], p['norm_g'], p['norm_b'], p['wq_h'], p['wk_h'], p['wv_h'],
      p['wo_h'], p['ff_ln_g'], p['ff_ln_b'], p['ff_w1'], p['ff_w2'], p['lin_out'], mask)
    return out.reshape(b, U, H, V, W, c).transpose(0, 1, 3, 2, 4, 5)


def sa_epi_inner_cl(buf6, p):
    b, U, V, H, W, c = buf6.shape
    L = V * W
    Bt = b * U * H
    c2 = c // 2
    tok = buf6.transpose(0, 1, 3, 2, 4, 5).reshape(Bt, L, c)
    sa_tok = tok[..., :c2]
    epi_tok = tok[..., c2:]
    bt_blk = Bt // 2 if Bt % 2 == 0 else Bt
    E = p['sa_in'].shape[1]
    specs = [pl.BlockSpec((bt_blk, L, c2), lambda i: (i, 0, 0)),
             pl.BlockSpec((bt_blk, L, c2), lambda i: (i, 0, 0)),
             _const_spec(p['sa_in'].shape), _const_spec(p['epi_in'].shape),
             _const_spec((1, E)), _const_spec((1, E)),
             _const_spec((1, E)), _const_spec((1, E)),
             _const_spec(p['wq_h'].shape), _const_spec(p['wk_h'].shape),
             _const_spec(p['wv_h'].shape), _const_spec(p['wo_h'].shape),
             _const_spec((1, E)), _const_spec((1, E)),
             _const_spec(p['ff_w1'].shape), _const_spec(p['ff_w2'].shape),
             _const_spec(p['lin_out'].shape)]
    sa_out = pl.pallas_call(
        _make_cross_kernel(NUM_HEADS),
        out_shape=jax.ShapeDtypeStruct((Bt, L, c2), jnp.float32),
        grid=(Bt // bt_blk,),
        in_specs=specs,
        out_specs=pl.BlockSpec((bt_blk, L, c2), lambda i: (i, 0, 0)),
        compiler_params=pltpu.CompilerParams(dimension_semantics=("parallel",)),
    )(sa_tok.astype(jnp.bfloat16), epi_tok.astype(jnp.bfloat16),
      p['sa_in'], p['epi_in'], p['sa_norm_g'], p['sa_norm_b'],
      p['epi_norm_g'], p['epi_norm_b'], p['wq_h'], p['wk_h'], p['wv_h'], p['wo_h'],
      p['ff_ln_g'], p['ff_ln_b'], p['ff_w1'], p['ff_w2'], p['lin_out'])
    out_tok = jnp.concatenate([sa_out, epi_tok.astype(jnp.float32)], axis=-1)
    return out_tok.reshape(b, U, H, V, W, c).transpose(0, 1, 3, 2, 4, 5)


# --------------------------------------------------------------------------
# Network blocks (channels-last, fp32 residual carry)
# --------------------------------------------------------------------------
def angular_conv_cl(x, w1, w2):
    b, n, h, w, c = x.shape
    A = w1.shape[1]
    a_in = x.transpose(0, 2, 3, 4, 1).reshape(b * h * w, c * n)
    out = mlp_chain(a_in, [(w1, None), (w2, None)], acts=("leaky", "leaky"),
                    slopes=(0.2, 0.2), out_dtype=jnp.bfloat16)
    return out.reshape(b, h, w, A, n).transpose(0, 4, 1, 2, 3)


@partial(jax.jit, static_argnums=(2,))
def sa_conv_block_cl(x, p, angRes):
    b, n, h, w, c = x.shape
    an = angRes
    s_out = conv33_chain(x, [(p['spa_w1'], p['spa_b1']), (p['spa_w2'], p['spa_b2'])],
                         acts=("leaky", "leaky"), slopes=(0.2, 0.2),
                         out_dtype=jnp.bfloat16)
    a_out = angular_conv_cl(x, p['ang_w1'], p['ang_w2'])
    sa_in = jnp.concatenate([s_out, a_out], axis=-1)
    sa_out = fuse11_33(sa_in, p['saf_w1'], p['saf_b1'], p['saf_w2'], p['saf_b2'],
                       out_dtype=jnp.float32)

    x6 = x.reshape(b, an, an, h, w, c)
    epih_out = epi_conv_module_cl(x6, p['epi_w1'], p['epi_w2'], an)
    x6v = x6.transpose(0, 2, 1, 4, 3, 5)          # swap u<->v, h<->w
    epiv = epi_conv_module_cl(x6v, p['epi_w1'], p['epi_w2'], an)
    E = p['epi_w1'].shape[-1]
    epiv_out = (epiv.reshape(b, an, an, w, h, E)
                    .transpose(0, 2, 1, 4, 3, 5)
                    .reshape(b, n, h, w, E))
    epi_in = jnp.concatenate([epih_out, epiv_out], axis=-1)
    epi_out = fuse11_33(epi_in, p['epif_w1'], p['epif_b1'], p['epif_w2'], p['epif_b2'],
                        out_dtype=jnp.float32)
    out = jnp.concatenate([sa_out, epi_out], axis=-1)
    return out + x


@jax.jit
def residual_conv(x, w, bias, shortcut):
    y = conv33_chain(x, [(w, bias)], acts=("none",), slopes=(0.0,), out_dtype=jnp.float32)
    return y + shortcut


def _conv1_seq(x, conv1):
    return conv33_chain(x, [(conv1[0], None), (conv1[1], None), (conv1[2], None)],
                        acts=("leaky", "leaky", "none"), slopes=(0.2, 0.2, 0.0),
                        out_dtype=jnp.float32)


@partial(jax.jit, static_argnums=(2,))
def epix_trans_block_cl(x, p, angRes):
    b, n, h, w, c = x.shape
    u = v = angRes
    shortcut = x
    x6 = x.reshape(b, u, v, h, w, c)
    t6 = epix_trans_inner_cl(x6.transpose(0, 2, 1, 4, 3, 5), p['epi'])
    t = t6.transpose(0, 2, 1, 4, 3, 5).reshape(b, n, h, w, c)
    buf = _conv1_seq(t, p['conv1']) + shortcut
    x6b = buf.reshape(b, u, v, h, w, c)
    t = epix_trans_inner_cl(x6b, p['epi']).reshape(b, n, h, w, c)
    buf = _conv1_seq(t, p['conv1']) + shortcut
    return buf


@partial(jax.jit, static_argnums=(2,))
def sa_epi_trans_block_cl(x, p, angRes):
    b, n, h, w, c = x.shape
    u = v = angRes
    shortcut = x
    x6 = x.reshape(b, u, v, h, w, c)
    t6 = sa_epi_inner_cl(x6.transpose(0, 2, 1, 4, 3, 5), p['epi'])
    t = t6.transpose(0, 2, 1, 4, 3, 5).reshape(b, n, h, w, c)
    buf = _conv1_seq(t, p['conv1']) + shortcut
    x6b = buf.reshape(b, u, v, h, w, c)
    t = sa_epi_inner_cl(x6b, p['epi']).reshape(b, n, h, w, c)
    buf = _conv1_seq(t, p['conv1']) + shortcut
    return buf


# --------------------------------------------------------------------------
# EpiFeatureRebuild_AS (feat_unfold=False, local_ensemble=False, cell_decode=False)
# --------------------------------------------------------------------------
def make_coord_jax(shape):
    seqs = []
    for nn in shape:
        r = 1.0 / nn
        seqs.append(-1.0 + r + 2.0 * r * jnp.arange(nn, dtype=jnp.float32))
    grid = jnp.stack(jnp.meshgrid(*seqs, indexing='ij'), axis=-1)
    return grid.reshape(-1, len(shape))


def _imnet_kp(ch):
    return _round_up(ch + 2, 128)


def query_feature_cl(feat_cl, coord, imnet):
    # TODO(synk): nearest-neighbour grid_sample is an XLA gather, not a Pallas kernel.
    B, Hs, Ws, C = feat_cl.shape
    Q = coord.shape[0]
    coord_ = jnp.clip(coord, -1 + 1e-6, 1 - 1e-6)
    iy = jnp.clip(jnp.round(((coord_[:, 0] + 1) * Hs - 1) / 2), 0, Hs - 1).astype(jnp.int32)
    ix = jnp.clip(jnp.round(((coord_[:, 1] + 1) * Ws - 1) / 2), 0, Ws - 1).astype(jnp.int32)
    idx = iy * Ws + ix
    flat = feat_cl.reshape(B, Hs * Ws, C)
    q_feat = jnp.take(flat, idx, axis=1)                         # (B, Q, C)
    fy = -1.0 + 1.0 / Hs + (2.0 / Hs) * iy.astype(jnp.float32)
    fx = -1.0 + 1.0 / Ws + (2.0 / Ws) * ix.astype(jnp.float32)
    rel = jnp.stack([coord[:, 0] - fy, coord[:, 1] - fx], axis=-1) \
        * jnp.array([Hs, Ws], jnp.float32)
    rel_b = jnp.broadcast_to(rel[None], (B, Q, 2))
    kp = _imnet_kp(C)
    parts = [q_feat.astype(jnp.bfloat16), rel_b.astype(jnp.bfloat16)]
    pad_cols = kp - C - 2
    if pad_cols:
        parts.append(jnp.zeros((B, Q, pad_cols), jnp.bfloat16))
    inp = jnp.concatenate(parts, axis=-1).reshape(B * Q, kp)
    pred = mlp_chain(inp, imnet['layers'],
                     acts=("relu", "relu", "relu", "relu", "none"),
                     slopes=(0.0,) * 5, out_dtype=jnp.float32)
    return pred.reshape(B, Q, -1)


def query_epi_cl(feat_cl, patchsize, af, imnet):
    B = feat_cl.shape[0]
    coord = make_coord_jax([af, patchsize])
    pred = query_feature_cl(feat_cl, coord, imnet)
    return pred.reshape(B, af, patchsize, -1)


def epi_rebuild_cl(x6, patchsize, af, imnet):
    b, u, v, h, w, c = x6.shape
    hx_in = x6.transpose(0, 1, 3, 2, 4, 5).reshape(b * u * h, v, w, c)
    hx = query_epi_cl(hx_in, patchsize, af, imnet)               # (b*u*h, af, ps, c)
    x2 = hx.reshape(b, u, h, af, patchsize, c).transpose(0, 1, 3, 2, 4, 5)
    vx_in = x2.transpose(0, 2, 4, 1, 3, 5).reshape(b * af * patchsize, u, h, c)
    vx = query_epi_cl(vx_in, patchsize, af, imnet)               # (b*af*ps, af, ps, c)
    out6 = vx.reshape(b, af, patchsize, af, patchsize, c).transpose(0, 3, 1, 4, 2, 5)
    return out6                                                  # (b, u', v', ps, ps, c)


# --------------------------------------------------------------------------
# LFsplit / FormOutput / head & tail
# --------------------------------------------------------------------------
def lf_split_cl(data, angRes):
    b, c, H, W = data.shape
    h, w = H // angRes, W // angRes
    x = data.reshape(b, c, angRes, h, angRes, w)
    return x.transpose(0, 2, 4, 3, 5, 1).reshape(b, angRes * angRes, h, w, c)


def form_output_cl(x):
    b, n, h, w, c = x.shape
    ar = int(round(math.sqrt(n)))
    x6 = x.reshape(b, ar, ar, h, w, c)
    return x6.transpose(0, 5, 1, 3, 2, 4).reshape(b, c, ar * h, ar * w)


@partial(jax.jit, static_argnums=(2,))
def feature_head(lr, fea_w, angRes):
    x_mv = lf_split_cl(lr, angRes)
    return conv33_chain(x_mv, [(fea_w, None)], acts=("none",), slopes=(0.0,),
                        out_dtype=jnp.float32)


@partial(jax.jit, static_argnums=(3, 4, 5))
def rebuild_tail(buffer, imnet, down, patchsize, af, angRes):
    b, n, h, w, c = buffer.shape
    buf6 = buffer.reshape(b, angRes, angRes, h, w, c)
    out6 = epi_rebuild_cl(buf6, patchsize, af, imnet)
    flat = out6.reshape(b, af * af, patchsize, patchsize, c)
    downed = mlp_chain(flat.reshape(-1, c),
                       [(down[0], None), (down[1], None), (down[2], None)],
                       acts=("leaky", "leaky", "none"), slopes=(0.1, 0.1, 0.0),
                       out_dtype=jnp.float32)
    downed = downed.reshape(b, af * af, patchsize, patchsize, 1)
    return form_output_cl(downed)


def net_forward(lr, patchsize, ang_factor, params, angRes):
    buffer = feature_head(lr, params['fea_w'], angRes)
    x0 = buffer
    for bp in params['cascade']['blocks']:
        buffer = sa_conv_block_cl(buffer, bp, angRes)
    buffer = residual_conv(buffer, params['cascade']['conv_w'],
                           params['cascade']['conv_b'], x0)
    alt = buffer
    for pe, ps_ in zip(params['alt_epix'], params['alt_saepi']):
        alt = epix_trans_block_cl(alt, pe, angRes)
        alt = sa_epi_trans_block_cl(alt, ps_, angRes)
    buffer = residual_conv(alt, params['alt_final_w'], params['alt_final_b'], buffer)
    out = rebuild_tail(buffer, params['imnet'], params['down'],
                       patchsize, ang_factor, angRes)
    return out.astype(jnp.float32)


# --------------------------------------------------------------------------
# Deterministic parameter initialization (pre-transposed bf16 weights)
# --------------------------------------------------------------------------
class ParamInit:
    def __init__(self, key):
        self._key = key

    def _next(self):
        self._key, sub = jax.random.split(self._key)
        return sub

    def conv_w(self, cout, cin, kd, kh, kw):
        fan = cin * kd * kh * kw
        return jax.random.normal(self._next(), (cout, cin, kd, kh, kw),
                                 jnp.float32) * (0.5 / math.sqrt(fan))

    def lin_w(self, dout, din):
        return jax.random.normal(self._next(), (dout, din),
                                 jnp.float32) * (0.5 / math.sqrt(din))

    def bias(self, n):
        return jnp.zeros((n,), jnp.float32)


def _t_conv33(w):   # (Cout, Cin, 1, 3, 3) -> (9, Cin, Cout), tap = ky*3+kx
    cout, cin = w.shape[0], w.shape[1]
    return w[:, :, 0].transpose(2, 3, 1, 0).reshape(9, cin, cout).astype(jnp.bfloat16)


def _t_conv111(w):  # (Cout, Cin, 1, 1, 1) -> (Cin, Cout)
    return w.reshape(w.shape[0], w.shape[1]).T.astype(jnp.bfloat16)


def _t_lin(w):      # (Dout, Din) -> (Din, Dout)
    return w.T.astype(jnp.bfloat16)


def _t_epi(w, angRes):  # (E, C, 1, angRes, K) -> (angRes*K, C, E), tap = v*K+k
    e, c, k = w.shape[0], w.shape[1], w.shape[4]
    return w[:, :, 0].transpose(2, 3, 1, 0).reshape(angRes * k, c, e).astype(jnp.bfloat16)


def _pad_rows(w, kp):
    k = w.shape[0]
    return w if k == kp else jnp.pad(w, ((0, kp - k), (0, 0)))


def _ln_pair(n):
    return jnp.ones((1, n), jnp.float32), jnp.zeros((1, n), jnp.float32)


def _init_mha_heads(pi, emb, num_heads=NUM_HEADS):
    hd = emb // num_heads
    in_proj = pi.lin_w(3 * emb, emb)
    wq = (in_proj[:emb] * (1.0 / math.sqrt(hd))).T          # (E_in, E_out), scale folded
    wk = in_proj[emb:2 * emb].T
    wv = in_proj[2 * emb:].T
    wo_t = pi.lin_w(emb, emb).T                              # (E_in=f, E_out)

    def split_cols(wt):
        return wt.reshape(emb, num_heads, hd).transpose(1, 0, 2).astype(jnp.bfloat16)

    return dict(wq_h=split_cols(wq), wk_h=split_cols(wk), wv_h=split_cols(wv),
                wo_h=wo_t.reshape(num_heads, hd, emb).astype(jnp.bfloat16))


def init_sa_conv(pi, ch, angRes):
    n = angRes * angRes
    A, E = ch // 4, ch // 2
    K = angRes // 2 * 2 + 1
    return dict(
        spa_w1=_t_conv33(pi.conv_w(ch, ch, 1, 3, 3)), spa_b1=pi.bias(ch),
        spa_w2=_t_conv33(pi.conv_w(ch, ch, 1, 3, 3)), spa_b2=pi.bias(ch),
        ang_w1=_t_conv111(pi.conv_w(A, ch * n, 1, 1, 1)),
        ang_w2=_t_conv111(pi.conv_w(A * n, A, 1, 1, 1)),
        epi_w1=_t_epi(pi.conv_w(E, ch, 1, angRes, K), angRes),
        epi_w2=_t_conv111(pi.conv_w(angRes * E, E, 1, 1, 1)),
        saf_w1=_t_conv111(pi.conv_w(ch, ch + A, 1, 1, 1)), saf_b1=pi.bias(ch),
        saf_w2=_t_conv33(pi.conv_w(ch // 2, ch, 1, 3, 3)), saf_b2=pi.bias(ch // 2),
        epif_w1=_t_conv111(pi.conv_w(ch, E + E, 1, 1, 1)), epif_b1=pi.bias(ch),
        epif_w2=_t_conv33(pi.conv_w(ch // 2, ch, 1, 3, 3)), epif_b2=pi.bias(ch // 2),
    )


def init_epixtrans(pi, c):
    emb = 2 * c
    ng, nb = _ln_pair(emb)
    fg, fb = _ln_pair(emb)
    d = dict(lin_in=_t_lin(pi.lin_w(emb, c)), norm_g=ng, norm_b=nb,
             ff_ln_g=fg, ff_ln_b=fb,
             ff_w1=_t_lin(pi.lin_w(2 * emb, emb)),
             ff_w2=_t_lin(pi.lin_w(emb, 2 * emb)),
             lin_out=_t_lin(pi.lin_w(c, emb)))
    d.update(_init_mha_heads(pi, emb))
    return d


def init_sa_epi_cross(pi, c):
    emb = 2 * c
    sg, sb = _ln_pair(emb)
    eg, eb = _ln_pair(emb)
    fg, fb = _ln_pair(emb)
    d = dict(sa_in=_t_lin(pi.lin_w(emb, c // 2)),
             epi_in=_t_lin(pi.lin_w(emb, c // 2)),
             sa_norm_g=sg, sa_norm_b=sb, epi_norm_g=eg, epi_norm_b=eb,
             ff_ln_g=fg, ff_ln_b=fb,
             ff_w1=_t_lin(pi.lin_w(2 * emb, emb)),
             ff_w2=_t_lin(pi.lin_w(emb, 2 * emb)),
             lin_out=_t_lin(pi.lin_w(c // 2, emb)))
    d.update(_init_mha_heads(pi, emb))
    return d


def init_net_params(key, angRes, ch=CH, layer_num=6):
    pi = ParamInit(key)
    kp = _imnet_kp(ch)
    return dict(
        fea_w=_t_conv33(pi.conv_w(ch, 1, 1, 3, 3)),
        cascade=dict(
            blocks=[init_sa_conv(pi, ch, angRes) for _ in range(layer_num)],
            conv_w=_t_conv33(pi.conv_w(ch, ch, 1, 3, 3)),
            conv_b=pi.bias(ch)),
        alt_epix=[dict(epi=init_epixtrans(pi, ch),
                       conv1=[_t_conv33(pi.conv_w(ch, ch, 1, 3, 3)) for _ in range(3)])
                  for _ in range(layer_num)],
        alt_saepi=[dict(epi=init_sa_epi_cross(pi, ch),
                        conv1=[_t_conv33(pi.conv_w(ch, ch, 1, 3, 3)) for _ in range(3)])
                   for _ in range(layer_num)],
        alt_final_w=_t_conv33(pi.conv_w(ch, ch, 1, 3, 3)),
        alt_final_b=pi.bias(ch),
        imnet=dict(layers=[
            (_pad_rows(_t_lin(pi.lin_w(256, ch + 2)), kp), pi.bias(256)),
            (_t_lin(pi.lin_w(256, 256)), pi.bias(256)),
            (_t_lin(pi.lin_w(256, 256)), pi.bias(256)),
            (_t_lin(pi.lin_w(256, 256)), pi.bias(256)),
            (_t_lin(pi.lin_w(ch, 256)), pi.bias(ch))]),
        down=[_t_conv111(pi.conv_w(ch // 4, ch, 1, 1, 1)),
              _t_conv111(pi.conv_w(ch // 16, ch // 4, 1, 1, 1)),
              _t_conv111(pi.conv_w(1, ch // 16, 1, 1, 1))],
    )


# --------------------------------------------------------------------------
if __name__ == "__main__":
    angRes = 2
    ang_factor = 4       # angRes_out
    patchsize = 8
    h = w = patchsize

    key = jax.random.PRNGKey(0)
    k_in, k_par = jax.random.split(key)
    lr = jax.random.normal(k_in, (1, 1, angRes * h, angRes * w), jnp.float32)
    params = init_net_params(k_par, angRes)

    out = net_forward(lr, patchsize, ang_factor, params, angRes)
    out = jax.block_until_ready(out)

    assert out.shape == (1, 1, ang_factor * patchsize, ang_factor * patchsize), out.shape
    assert bool(jnp.all(jnp.isfinite(out)))
    print("KERNEL_OK")
</pallas_src>

<mosaic_0001>
module attributes {stable_mosaic.version = 11 : i64} {
  func.func @kernel(%arg0: i32, %arg1: memref<2x10x10x1xbf16, #tpu.memory_space<vmem>>, %arg2: memref<9x1x64xbf16, #tpu.memory_space<vmem>>, %arg3: memref<2x8x8x64xf32, #tpu.memory_space<vmem>>) attributes {dimension_semantics = [#tpu.dimension_semantics<parallel>], iteration_bounds = array<i64: 2>, scalar_prefetch = 0 : i64, scratch_operands = 0 : i64, tpu.core_type = #tpu.core_type<tc>, window_params = [{transform_indices = @transform_0, window_bounds = array<i64: 2, 10, 10, 1>}, {pipeline_mode = #tpu.pipeline_mode<synchronous>, transform_indices = @transform_1, window_bounds = array<i64: 9, 1, 64>}, {transform_indices = @transform_2, window_bounds = array<i64: 2, 8, 8, 64>}]} {
    %cst = arith.constant 0.000000e+00 : f32
    %0 = vector.broadcast %cst : f32 to vector<128x64xf32>
    %c0 = arith.constant 0 : index
    %c0_0 = arith.constant 0 : index
    %c0_1 = arith.constant 0 : index
    %c0_2 = arith.constant 0 : index
    %1 = vector.load %arg1[%c0, %c0_0, %c0_1, %c0_2] : memref<2x10x10x1xbf16, #tpu.memory_space<vmem>>, vector<2x8x8x1xbf16>
    %2 = vector.shape_cast %1 : vector<2x8x8x1xbf16> to vector<128x1xbf16>
    %3 = arith.extf %2 : vector<128x1xbf16> to vector<128x1xf32>
    %c0_3 = arith.constant 0 : index
    %c0_4 = arith.constant 0 : index
    %c0_5 = arith.constant 0 : index
    %4 = vector.load %arg2[%c0_3, %c0_4, %c0_5] : memref<9x1x64xbf16, #tpu.memory_space<vmem>>, vector<1x1x64xbf16>
    %5 = vector.shape_cast %4 : vector<1x1x64xbf16> to vector<1x64xbf16>
    %6 = arith.extf %5 : vector<1x64xbf16> to vector<1x64xf32>
    %7 = vector.broadcast %3 : vector<128x1xf32> to vector<128x64xf32>
    %8 = vector.broadcast %6 : vector<1x64xf32> to vector<128x64xf32>
    %9 = arith.mulf %7, %8 : vector<128x64xf32>
    %10 = arith.addf %0, %9 : vector<128x64xf32>
    %c0_6 = arith.constant 0 : index
    %c0_7 = arith.constant 0 : index
    %c1 = arith.constant 1 : index
    %c0_8 = arith.constant 0 : index
    %11 = vector.load %arg1[%c0_6, %c0_7, %c1, %c0_8] : memref<2x10x10x1xbf16, #tpu.memory_space<vmem>>, vector<2x8x8x1xbf16>
    %12 = vector.shape_cast %11 : vector<2x8x8x1xbf16> to vector<128x1xbf16>
    %13 = arith.extf %12 : vector<128x1xbf16> to vector<128x1xf32>
    %c1_9 = arith.constant 1 : index
    %c0_10 = arith.constant 0 : index
    %c0_11 = arith.constant 0 : index
    %14 = vector.load %arg2[%c1_9, %c0_10, %c0_11] : memref<9x1x64xbf16, #tpu.memory_space<vmem>>, vector<1x1x64xbf16>
    %15 = vector.shape_cast %14 : vector<1x1x64xbf16> to vector<1x64xbf16>
    %16 = arith.extf %15 : vector<1x64xbf16> to vector<1x64xf32>
    %17 = vector.broadcast %13 : vector<128x1xf32> to vector<128x64xf32>
    %18 = vector.broadcast %16 : vector<1x64xf32> to vector<128x64xf32>
    %19 = arith.mulf %17, %18 : vector<128x64xf32>
    %20 = arith.addf %10, %19 : vector<128x64xf32>
    %c0_12 = arith.constant 0 : index
    %c0_13 = arith.constant 0 : index
    %c2 = arith.constant 2 : index
    %c0_14 = arith.constant 0 : index
    %21 = vector.load %arg1[%c0_12, %c0_13, %c2, %c0_14] : memref<2x10x10x1xbf16, #tpu.memory_space<vmem>>, vector<2x8x8x1xbf16>
    %22 = vector.shape_cast %21 : vector<2x8x8x1xbf16> to vector<128x1xbf16>
    %23 = arith.extf %22 : vector<128x1xbf16> to vector<128x1xf32>
    %c2_15 = arith.constant 2 : index
    %c0_16 = arith.constant 0 : index
    %c0_17 = arith.constant 0 : index
    %24 = vector.load %arg2[%c2_15, %c0_16, %c0_17] : memref<9x1x64xbf16, #tpu.memory_space<vmem>>, vector<1x1x64xbf16>
    %25 = vector.shape_cast %24 : vector<1x1x64xbf16> to vector<1x64xbf16>
    %26 = arith.extf %25 : vector<1x64xbf16> to vector<1x64xf32>
    %27 = vector.broadcast %23 : vector<128x1xf32> to vector<128x64xf32>
    %28 = vector.broadcast %26 : vector<1x64xf32> to vector<128x64xf32>
    %29 = arith.mulf %27, %28 : vector<128x64xf32>
    %30 = arith.addf %20, %29 : vector<128x64xf32>
    %c0_18 = arith.constant 0 : index
    %c1_19 = arith.constant 1 : index
    %c0_20 = arith.constant 0 : index
    %c0_21 = arith.constant 0 : index
    %31 = vector.load %arg1[%c0_18, %c1_19, %c0_20, %c0_21] : memref<2x10x10x1xbf16, #tpu.memory_space<vmem>>, vector<2x8x8x1xbf16>
    %32 = vector.shape_cast %31 : vector<2x8x8x1xbf16> to vector<128x1xbf16>
    %33 = arith.extf %32 : vector<128x1xbf16> to vector<128x1xf32>
    %c3 = arith.constant 3 : index
    %c0_22 = arith.constant 0 : index
    %c0_23 = arith.constant 0 : index
    %34 = vector.load %arg2[%c3, %c0_22, %c0_23] : memref<9x1x64xbf16, #tpu.memory_space<vmem>>, vector<1x1x64xbf16>
    %35 = vector.shape_cast %34 : vector<1x1x64xbf16> to vector<1x64xbf16>
    %36 = arith.extf %35 : vector<1x64xbf16> to vector<1x64xf32>
    %37 = vector.broadcast %33 : vector<128x1xf32> to vector<128x64xf32>
    %38 = vector.broadcast %36 : vector<1x64xf32> to vector<128x64xf32>
    %39 = arith.mulf %37, %38 : vector<128x64xf32>
    %40 = arith.addf %30, %39 : vector<128x64xf32>
    %c0_24 = arith.constant 0 : index
    %c1_25 = arith.constant 1 : index
    %c1_26 = arith.constant 1 : index
    %c0_27 = arith.constant 0 : index
    %41 = vector.load %arg1[%c0_24, %c1_25, %c1_26, %c0_27] : memref<2x10x10x1xbf16, #tpu.memory_space<vmem>>, vector<2x8x8x1xbf16>
    %42 = vector.shape_cast %41 : vector<2x8x8x1xbf16> to vector<128x1xbf16>
    %43 = arith.extf %42 : vector<128x1xbf16> to vector<128x1xf32>
    %c4 = arith.constant 4 : index
    %c0_28 = arith.constant 0 : index
    %c0_29 = arith.constant 0 : index
    %44 = vector.load %arg2[%c4, %c0_28, %c0_29] : memref<9x1x64xbf16, #tpu.memory_space<vmem>>, vector<1x1x64xbf16>
    %45 = vector.shape_cast %44 : vector<1x1x64xbf16> to vector<1x64xbf16>
    %46 = arith.extf %45 : vector<1x64xbf16> to vector<1x64xf32>
    %47 = vector.broadcast %43 : vector<128x1xf32> to vector<128x64xf32>
    %48 = vector.broadcast %46 : vector<1x64xf32> to vector<128x64xf32>
    %49 = arith.mulf %47, %48 : vector<128x64xf32>
    %50 = arith.addf %40, %49 : vector<128x64xf32>
    %c0_30 = arith.constant 0 : index
    %c1_31 = arith.constant 1 : index
    %c2_32 = arith.constant 2 : index
    %c0_33 = arith.constant 0 : index
    %51 = vector.load %arg1[%c0_30, %c1_31, %c2_32, %c0_33] : memref<2x10x10x1xbf16, #tpu.memory_space<vmem>>, vector<2x8x8x1xbf16>
    %52 = vector.shape_cast %51 : vector<2x8x8x1xbf16> to vector<128x1xbf16>
    %53 = arith.extf %52 : vector<128x1xbf16> to vector<128x1xf32>
    %c5 = arith.constant 5 : index
    %c0_34 = arith.constant 0 : index
    %c0_35 = arith.constant 0 : index
    %54 = vector.load %arg2[%c5, %c0_34, %c0_35] : memref<9x1x64xbf16, #tpu.memory_space<vmem>>, vector<1x1x64xbf16>
    %55 = vector.shape_cast %54 : vector<1x1x64xbf16> to vector<1x64xbf16>
    %56 = arith.extf %55 : vector<1x64xbf16> to vector<1x64xf32>
    %57 = vector.broadcast %53 : vector<128x1xf32> to vector<128x64xf32>
    %58 = vector.broadcast %56 : vector<1x64xf32> to vector<128x64xf32>
    %59 = arith.mulf %57, %58 : vector<128x64xf32>
    %60 = arith.addf %50, %59 : vector<128x64xf32>
    %c0_36 = arith.constant 0 : index
    %c2_37 = arith.constant 2 : index
    %c0_38 = arith.constant 0 : index
    %c0_39 = arith.constant 0 : index
    %61 = vector.load %arg1[%c0_36, %c2_37, %c0_38, %c0_39] : memref<2x10x10x1xbf16, #tpu.memory_space<vmem>>, vector<2x8x8x1xbf16>
    %62 = vector.shape_cast %61 : vector<2x8x8x1xbf16> to vector<128x1xbf16>
    %63 = arith.extf %62 : vector<128x1xbf16> to vector<128x1xf32>
    %c6 = arith.constant 6 : index
    %c0_40 = arith.constant 0 : index
    %c0_41 = arith.constant 0 : index
    %64 = vector.load %arg2[%c6, %c0_40, %c0_41] : memref<9x1x64xbf16, #tpu.memory_space<vmem>>, vector<1x1x64xbf16>
    %65 = vector.shape_cast %64 : vector<1x1x64xbf16> to vector<1x64xbf16>
    %66 = arith.extf %65 : vector<1x64xbf16> to vector<1x64xf32>
    %67 = vector.broadcast %63 : vector<128x1xf32> to vector<128x64xf32>
    %68 = vector.broadcast %66 : vector<1x64xf32> to vector<128x64xf32>
    %69 = arith.mulf %67, %68 : vector<128x64xf32>
    %70 = arith.addf %60, %69 : vector<128x64xf32>
    %c0_42 = arith.constant 0 : index
    %c2_43 = arith.constant 2 : index
    %c1_44 = arith.constant 1 : index
    %c0_45 = arith.constant 0 : index
    %71 = vector.load %arg1[%c0_42, %c2_43, %c1_44, %c0_45] : memref<2x10x10x1xbf16, #tpu.memory_space<vmem>>, vector<2x8x8x1xbf16>
    %72 = vector.shape_cast %71 : vector<2x8x8x1xbf16> to vector<128x1xbf16>
    %73 = arith.extf %72 : vector<128x1xbf16> to vector<128x1xf32>
    %c7 = arith.constant 7 : index
    %c0_46 = arith.constant 0 : index
    %c0_47 = arith.constant 0 : index
    %74 = vector.load %arg2[%c7, %c0_46, %c0_47] : memref<9x1x64xbf16, #tpu.memory_space<vmem>>, vector<1x1x64xbf16>
    %75 = vector.shape_cast %74 : vector<1x1x64xbf16> to vector<1x64xbf16>
    %76 = arith.extf %75 : vector<1x64xbf16> to vector<1x64xf32>
    %77 = vector.broadcast %73 : vector<128x1xf32> to vector<128x64xf32>
    %78 = vector.broadcast %76 : vector<1x64xf32> to vector<128x64xf32>
    %79 = arith.mulf %77, %78 : vector<128x64xf32>
    %80 = arith.addf %70, %79 : vector<128x64xf32>
    %c0_48 = arith.constant 0 : index
    %c2_49 = arith.constant 2 : index
    %c2_50 = arith.constant 2 : index
    %c0_51 = arith.constant 0 : index
    %81 = vector.load %arg1[%c0_48, %c2_49, %c2_50, %c0_51] : memref<2x10x10x1xbf16, #tpu.memory_space<vmem>>, vector<2x8x8x1xbf16>
    %82 = vector.shape_cast %81 : vector<2x8x8x1xbf16> to vector<128x1xbf16>
    %83 = arith.extf %82 : vector<128x1xbf16> to vector<128x1xf32>
    %c8 = arith.constant 8 : index
    %c0_52 = arith.constant 0 : index
    %c0_53 = arith.constant 0 : index
    %84 = vector.load %arg2[%c8, %c0_52, %c0_53] : memref<9x1x64xbf16, #tpu.memory_space<vmem>>, vector<1x1x64xbf16>
    %85 = vector.shape_cast %84 : vector<1x1x64xbf16> to vector<1x64xbf16>
    %86 = arith.extf %85 : vector<1x64xbf16> to vector<1x64xf32>
    %87 = vector.broadcast %83 : vector<128x1xf32> to vector<128x64xf32>
    %88 = vector.broadcast %86 : vector<1x64xf32> to vector<128x64xf32>
    %89 = arith.mulf %87, %88 : vector<128x64xf32>
    %90 = arith.addf %80, %89 : vector<128x64xf32>
    %91 = vector.shape_cast %90 : vector<128x64xf32> to vector<2x8x8x64xf32>
    %c0_54 = arith.constant 0 : index
    %c0_55 = arith.constant 0 : index
    %c0_56 = arith.constant 0 : index
    %c0_57 = arith.constant 0 : index
    %92 = vector.load %arg3[%c0_54, %c0_55, %c0_56, %c0_57] : memref<2x8x8x64xf32, #tpu.memory_space<vmem>>, vector<2x8x8x64xf32>
    tpu.vector_store %arg3[%c0_54, %c0_55, %c0_56, %c0_57], %91 {strides = array<i32>} : memref<2x8x8x64xf32, #tpu.memory_space<vmem>>, vector<2x8x8x64xf32>,
    return
  }
  func.func @transform_0(%arg0: i32) -> (i32, i32, i32, i32) {
    %c0_i32 = arith.constant 0 : i32
    %c0_i32_0 = arith.constant 0 : i32
    %c0_i32_1 = arith.constant 0 : i32
    %c0_i32_2 = arith.constant 0 : i32
    return %arg0, %c0_i32, %c0_i32_0, %c0_i32_1 : i32, i32, i32, i32
  }
  func.func @transform_1(%arg0: i32) -> (i32, i32, i32) {
    %c0_i32 = arith.constant 0 : i32
    %c0_i32_0 = arith.constant 0 : i32
    %c0_i32_1 = arith.constant 0 : i32
    %c0_i32_2 = arith.constant 0 : i32
    return %c0_i32, %c0_i32_0, %c0_i32_1 : i32, i32, i32
  }
  func.func @transform_2(%arg0: i32) -> (i32, i32, i32, i32) {
    %c0_i32 = arith.constant 0 : i32
    %c0_i32_0 = arith.constant 0 : i32
    %c0_i32_1 = arith.constant 0 : i32
    %c0_i32_2 = arith.constant 0 : i32
    return %arg0, %c0_i32, %c0_i32_0, %c0_i32_1 : i32, i32, i32, i32
  }
}

</mosaic_0001>

<llo_original>
// kernel: feature_head.1
$region0: #{feature_head.1}
  #allocation0 [shape = 'u32[]', space=smem, size = 0x4, offset = 0x4, fixed_abs, tag = 'smem constant byte address 0x4 - core index']
  #allocation1 [shape = 'u32[144,128]{1,0:T(1,128)}', space=vmem, size = 0x12000, scoped, tag = 'internal scratch']
  %s0 = inlined_call_operand.vmem [shape: bf16[4,10,10,1], index: 0, kind: input, shape index: {}]
  %s1 = inlined_call_operand.vmem [shape: bf16[9,1,64], index: 1, kind: input, shape index: {}]
  %s2 = inlined_call_operand.hbm [shape: f32[4,8,8,64], index: 2, kind: output, shape index: {}]
  %s3 = sld [smem:[#allocation0]]
  $region41: #{feature_head.1} parent=0
    _
  %s5 = ssub.s32 1, %s3
  %s6 = scalar_select 0, %s5, %s3
  $region1: #{feature_head.1} parent=0
    #allocation2 [shape = 'u8[131072]{0}', space=vmem, size = 0x20000, scoped, tag = 'output window, operand 0']
    #allocation3 [shape = 's32[2]{0}', space=sflag, size = 0x8, scoped, tag = 'scoped memory for feature_head.1']
    %7 = vsyncpa [#allocation3], 0
    %s8 = scalar_lea.sflag [#allocation3], 1
    %9 = vsyncpa %s8, 0
    loop: start=0, step=1, limit=4
    $region2: #{feature_head.1} parent=1 // loop_pre_header
      _
    $region3: #{feature_head.1} parent=1 // loop_header
      %s11 = sphi 0, %s15
      %p12 = scmp.ge.s32.totalorder %s11, 4
      %s21 = sphi 0, %s23
      %s24 = sphi 0, %s21
      %s25 = sphi 0, %s24
      %s41 = sphi 0, %s25
      %s45 = sphi 0, %s45
      %s47 = sphi 0, %s45
      %s48 = sphi 0, %s47
      %s62 = sphi 0, %s48
      %s68 = sphi 0, %s70
      %s71 = sphi 0, %s68
      %s72 = sphi 0, %s71
      %s88 = sphi 0, %s72
    $region4: #{feature_head.1} parent=1 // loop_header_branch
      %14 = sbr.rel (%p12) target = $region8
    $region5: #{feature_head.1} parent=1 // loop_body
      %s16 = ssub.s32 %s11, 1
      %s17 = ssub.s32 %s11, 2
      %s18 = sadd.s32 %s11, 1
      %s19 = ssub.s32 %s11, %s18
      %p20 = scmp.eq.s32.totalorder %s19, 0
      %s22 = sadd.s32 %s21, 1
      %s23 = scalar_select %p20, %s21, %s22
      %p26 = pneg %p20
      %p27 = scmp.eq.s32.totalorder %s11, 1
      %p28 = por %p26, %p27
      %p29 = scmp.ne.s32.totalorder %s21, %s24
      %p30 = scmp.eq.s32.totalorder %s11, 0
      %p31 = por %p29, %p30
      %p32 = scmp.ne.s32.totalorder %s21, %s24
      %p33 = scmp.eq.s32.totalorder %s16, 1
      %p34 = por %p32, %p33
      %p35 = scmp.ne.s32.totalorder %s24, %s25
      %p36 = scmp.eq.s32.totalorder %s16, 0
      %p37 = por %p35, %p36
      %p38 = scmp.ne.s32.totalorder %s24, %s25
      %p39 = scmp.eq.s32.totalorder %s17, 1
      %p40 = por %p38, %p39
      %p42 = scmp.ne.s32.totalorder %s25, %s41
      %p43 = scmp.eq.s32.totalorder %s17, 0
      %p44 = por %p42, %p43
      %s46 = sadd.s32 %s45, 1
      %p49 = scmp.eq.s32.totalorder %s11, 1
      %p50 = scmp.ne.s32.totalorder %s45, %s47
      %p51 = scmp.eq.s32.totalorder %s11, 0
      %p52 = por %p50, %p51
      %p53 = scmp.ne.s32.totalorder %s45, %s47
      %p54 = scmp.eq.s32.totalorder %s16, 1
      %p55 = por %p53, %p54
      %p56 = scmp.ne.s32.totalorder %s47, %s48
      %p57 = scmp.eq.s32.totalorder %s16, 0
      %p58 = por %p56, %p57
      %p59 = scmp.ne.s32.totalorder %s47, %s48
      %p60 = scmp.eq.s32.totalorder %s17, 1
      %p61 = por %p59, %p60
      %p63 = scmp.ne.s32.totalorder %s48, %s62
      %p64 = scmp.eq.s32.totalorder %s17, 0
      %p65 = por %p63, %p64
      %s66 = ssub.s32 %s11, %s18
      %p67 = scmp.eq.s32.totalorder %s66, 0
      %s69 = sadd.s32 %s68, 1
      %s70 = scalar_select %p67, %s68, %s69
      %p73 = pneg %p67
      %p74 = scmp.eq.s32.totalorder %s11, 1
      %p75 = por %p73, %p74
      %p76 = scmp.ne.s32.totalorder %s68, %s71
      %p77 = scmp.eq.s32.totalorder %s11, 0
      %p78 = por %p76, %p77
      %p79 = scmp.ne.s32.totalorder %s68, %s71
      %p80 = scmp.eq.s32.totalorder %s16, 1
      %p81 = por %p79, %p80
      %p82 = scmp.ne.s32.totalorder %s71, %s72
      %p83 = scmp.eq.s32.totalorder %s16, 0
      %p84 = por %p82, %p83
      %p85 = scmp.ne.s32.totalorder %s71, %s72
      %p86 = scmp.eq.s32.totalorder %s17, 1
      %p87 = por %p85, %p86
      %p89 = scmp.ne.s32.totalorder %s72, %s88
      %p90 = scmp.eq.s32.totalorder %s17, 0
      %p91 = por %p89, %p90
      %p92 = scmp.le.s32.totalorder 1, %s11
      %p93 = scmp.lt.s32.totalorder %s11, 3
      %p94 = pnand %p92, %p93
      %p95 = pneg %p94
      // Predicated region
      $region9: #{feature_head.1} parent=5 // pred_check
        _
      $region10: #{feature_head.1} parent=5 // pred_check_branch
        %97 = sbr.rel (%p94) target = $region12
      $region11: #{feature_head.1} parent=5 // pred_region
        %s98 = ssub.s32 %s11, 1
        // Predicated region
        $region13: #{feature_head.1} parent=11 // pred_check
          %p99 = pneg %p58
        $region14: #{feature_head.1} parent=11 // pred_check_branch
          %101 = sbr.rel (%p99) target = $region16
        $region15: #{feature_head.1} parent=11 // pred_region
          _
        $region16: #{feature_head.1} parent=11 // pred_fallthru
          _
      $region12: #{feature_head.1} parent=5 // pred_fallthru
        _
      %p102 = scmp.lt.s32.totalorder %s11, 2
      // Predicated region
      $region17: #{feature_head.1} parent=5 // pred_check
        %p103 = pneg %p102
      $region18: #{feature_head.1} parent=5 // pred_check_branch
        %105 = sbr.rel (%p103) target = $region20
      $region19: #{feature_head.1} parent=5 // pred_region
        // Predicated region
        $region21: #{feature_head.1} parent=19 // pred_check
          %p106 = pneg %p31
        $region22: #{feature_head.1} parent=19 // pred_check_branch
          %108 = sbr.rel (%p106) target = $region24
        $region23: #{feature_head.1} parent=19 // pred_region
          %s109 = smul.u32 2, %s11
          %p110 = scmp.lt.s32.totalorder %s109, 3
          %s111 = scalar_select %p110, %s109, 3
          %s112 = smul.addr %s111, 20
          %s113 = smul.addr %s112, 4
          %s114 = scalar_lea.vmem %s0, %s113
          %s115 = smul.u32 2, %s11
        $region24: #{feature_head.1} parent=19 // pred_fallthru
          _
      $region20: #{feature_head.1} parent=5 // pred_fallthru
        _
      %p116 = scmp.le.s32.totalorder 1, %s11
      %p117 = scmp.lt.s32.totalorder %s11, 3
      %p118 = pnand %p116, %p117
      %p119 = pneg %p118
      // Predicated region
      $region25: #{feature_head.1} parent=5 // pred_check
        _
      $region26: #{feature_head.1} parent=5 // pred_check_branch
        %121 = sbr.rel (%p118) target = $region28
      $region27: #{feature_head.1} parent=5 // pred_region
        %s122 = ssub.s32 %s11, 1
        %s123 = smul.u32 2, %s16
        %p124 = scmp.lt.s32.totalorder %s123, 3
        %s125 = scalar_select %p124, %s123, 3
        %s126 = smul.addr %s125, 20
        %s127 = smul.addr %s126, 4
        %s128 = scalar_lea.vmem %s0, %s127
        %p129 = pneg %p37
        %p130 = pneg %p34
        %p131 = pneg %p58
        %p132 = pneg %p55
        %p133 = pneg %p84
        %p134 = pneg %p81
        %s135 = sand.u32 %s71, 1
        %s136 = scalar_lea.sflag [#allocation3], %s135
        %s137 = sand.u32 %s71, 1
        %s138 = smul.addr %s137, 128
        %s139 = scalar_lea.vmem [#allocation2], %s138
        %s140 = smul.u32 2, %s16
        %p141 = scmp.lt.s32.totalorder %s140, 3
        %s142 = scalar_select %p141, %s140, 3
        %s143 = smul.addr %s142, 20
        %s144 = smul.addr %s143, 4
        %s145 = scalar_lea.vmem %s0, %s144
        %s146 = smul.u32 2, %s16
        %s147 = smul.u32 2, %s16
        %v148 = vld [vmem:[%s145] sm:$0xf]
        %v149 = vld [vmem:[%s145 + $0x8] sm:$0xf]
        %v150 = vld [vmem:[%s145 + $0x10] sm:$0xf]
        %v151 = vld [vmem:[%s145 + $0x18] sm:$0xf]
        %v152 = vld [vmem:[%s145 + $0x20] sm:$0xf]
        %v153 = vld [vmem:[%s145 + $0x28] sm:$0xf]
        %v154 = vld [vmem:[%s145 + $0x30] sm:$0xf]
        %v155 = vld [vmem:[%s145 + $0x38] sm:$0xf]
        %v156 = vld [vmem:[%s145 + $0x50] sm:$0xf]
        %v157 = vld [vmem:[%s145 + $0x58] sm:$0xf]
        %v158 = vld [vmem:[%s145 + $0x60] sm:$0xf]
        %v159 = vld [vmem:[%s145 + $0x68] sm:$0xf]
        %v160 = vld [vmem:[%s145 + $0x70] sm:$0xf]
        %v161 = vld [vmem:[%s145 + $0x78] sm:$0xf]
        %v162 = vld [vmem:[%s145 + $0x80] sm:$0xf]
        %v163 = vld [vmem:[%s145 + $0x88] sm:$0xf]
        %v164 = vunpack.c.l.bf16 %v148
        %v165 = vunpack.c.l.bf16 %v149
        %v166 = vunpack.c.l.bf16 %v150
        %v167 = vunpack.c.l.bf16 %v151
        %v168 = vunpack.c.l.bf16 %v152
        %v169 = vunpack.c.l.bf16 %v153
        %v170 = vunpack.c.l.bf16 %v154
        %v171 = vunpack.c.l.bf16 %v155
        %v172 = vunpack.c.l.bf16 %v156
        %v173 = vunpack.c.l.bf16 %v157
        %v174 = vunpack.c.l.bf16 %v158
        %v175 = vunpack.c.l.bf16 %v159
        %v176 = vunpack.c.l.bf16 %v160
        %v177 = vunpack.c.l.bf16 %v161
        %v178 = vunpack.c.l.bf16 %v162
        %v179 = vunpack.c.l.bf16 %v163
        %v180 = vld [vmem:[%s1] sm:$0x1]
        %v181 = vunpack.c.l.bf16 %v180
        %183 = vset.pattern.permute.xlu0 0
        %184 = vperm.xlu0 %183, %v164
        %v185 = vpop.permute.xlu0 %184
        %188 = vset.pattern.permute.xlu0 0
        %189 = vperm.xlu0 %188, %v165
        %v190 = vpop.permute.xlu0 %189
        %193 = vset.pattern.permute.xlu0 0
        %194 = vperm.xlu0 %193, %v166
        %v195 = vpop.permute.xlu0 %194
        %198 = vset.pattern.permute.xlu0 0
        %199 = vperm.xlu0 %198, %v167
        %v200 = vpop.permute.xlu0 %199
        %203 = vset.pattern.permute.xlu0 0
        %204 = vperm.xlu0 %203, %v168
        %v205 = vpop.permute.xlu0 %204
        %208 = vset.pattern.permute.xlu0 0
        %209 = vperm.xlu0 %208, %v169
        %v210 = vpop.permute.xlu0 %209
        %213 = vset.pattern.permute.xlu0 0
        %214 = vperm.xlu0 %213, %v170
        %v215 = vpop.permute.xlu0 %214
        %218 = vset.pattern.permute.xlu0 0
        %219 = vperm.xlu0 %218, %v171
        %v220 = vpop.permute.xlu0 %219
        %223 = vset.pattern.permute.xlu0 0
        %224 = vperm.xlu0 %223, %v172
        %v225 = vpop.permute.xlu0 %224
        %228 = vset.pattern.permute.xlu0 0
        %229 = vperm.xlu0 %228, %v173
        %v230 = vpop.permute.xlu0 %229
        %233 = vset.pattern.permute.xlu0 0
        %234 = vperm.xlu0 %233, %v174
        %v235 = vpop.permute.xlu0 %234
        %238 = vset.pattern.permute.xlu0 0
        %239 = vperm.xlu0 %238, %v175
        %v240 = vpop.permute.xlu0 %239
        %243 = vset.pattern.permute.xlu0 0
        %244 = vperm.xlu0 %243, %v176
        %v245 = vpop.permute.xlu0 %244
        %248 = vset.pattern.permute.xlu0 0
        %249 = vperm.xlu0 %248, %v177
        %v250 = vpop.permute.xlu0 %249
        %253 = vset.pattern.permute.xlu0 0
        %254 = vperm.xlu0 %253, %v178
        %v255 = vpop.permute.xlu0 %254
        %258 = vset.pattern.permute.xlu0 0
        %259 = vperm.xlu0 %258, %v179
        %v260 = vpop.permute.xlu0 %259
        %v262 = vlaneseq
        %v263 = vshrl.u32 %v262, 7
        %v264 = vsub.s32 0, %v263
        %v265 = vrot.slane %v181, %v264
        %v266 = vmul.f32 %v185, %v265
        %v267 = vmul.f32 %v190, %v265
        %v268 = vmul.f32 %v195, %v265
        %v269 = vmul.f32 %v200, %v265
        %v270 = vmul.f32 %v205, %v265
        %v271 = vmul.f32 %v210, %v265
        %v272 = vmul.f32 %v215, %v265
        %v273 = vmul.f32 %v220, %v265
        %v274 = vmul.f32 %v225, %v265
        %v275 = vmul.f32 %v230, %v265
        %v276 = vmul.f32 %v235, %v265
        %v277 = vmul.f32 %v240, %v265
        %v278 = vmul.f32 %v245, %v265
        %v279 = vmul.f32 %v250, %v265
        %v280 = vmul.f32 %v255, %v265
        %v281 = vmul.f32 %v260, %v265
        %v282 = vadd.f32 %v266, 0.0
        %v283 = vadd.f32 %v267, 0.0
        %v284 = vadd.f32 %v268, 0.0
        %v285 = vadd.f32 %v269, 0.0
        %v286 = vadd.f32 %v270, 0.0
        %v287 = vadd.f32 %v271, 0.0
        %v288 = vadd.f32 %v272, 0.0
        %v289 = vadd.f32 %v273, 0.0
        %v290 = vadd.f32 %v274, 0.0
        %v291 = vadd.f32 %v275, 0.0
        %v292 = vadd.f32 %v276, 0.0
        %v293 = vadd.f32 %v277, 0.0
        %v294 = vadd.f32 %v278, 0.0
        %v295 = vadd.f32 %v279, 0.0
        %v296 = vadd.f32 %v280, 0.0
        %v297 = vadd.f32 %v281, 0.0
        %v298 = vld [vmem:[%s145] sm:$0xf]
        %v299 = vld [vmem:[%s145 + $0x4] sm:$0x1]
        %v300 = vld [vmem:[%s145 + $0x8] sm:$0xf]
        %v301 = vld [vmem:[%s145 + $0xc] sm:$0x1]
        %v302 = vld [vmem:[%s145 + $0x10] sm:$0xf]
        %v303 = vld [vmem:[%s145 + $0x14] sm:$0x1]
        %v304 = vld [vmem:[%s145 + $0x18] sm:$0xf]
        %v305 = vld [vmem:[%s145 + $0x1c] sm:$0x1]
        %v306 = vld [vmem:[%s145 + $0x20] sm:$0xf]
        %v307 = vld [vmem:[%s145 + $0x24] sm:$0x1]
        %v308 = vld [vmem:[%s145 + $0x28] sm:$0xf]
        %v309 = vld [vmem:[%s145 + $0x2c] sm:$0x1]
        %v310 = vld [vmem:[%s145 + $0x30] sm:$0xf]
        %v311 = vld [vmem:[%s145 + $0x34] sm:$0x1]
        %v312 = vld [vmem:[%s145 + $0x38] sm:$0xf]
        %v313 = vld [vmem:[%s145 + $0x3c] sm:$0x1]
        %v314 = vld [vmem:[%s145 + $0x50] sm:$0xf]
        %v315 = vld [vmem:[%s145 + $0x54] sm:$0x1]
        %v316 = vld [vmem:[%s145 + $0x58] sm:$0xf]
        %v317 = vld [vmem:[%s145 + $0x5c] sm:$0x1]
        %v318 = vld [vmem:[%s145 + $0x60] sm:$0xf]
        %v319 = vld [vmem:[%s145 + $0x64] sm:$0x1]
        %v320 = vld [vmem:[%s145 + $0x68] sm:$0xf]
        %v321 = vld [vmem:[%s145 + $0x6c] sm:$0x1]
        %v322 = vld [vmem:[%s145 + $0x70] sm:$0xf]
        %v323 = vld [vmem:[%s145 + $0x74] sm:$0x1]
        %v324 = vld [vmem:[%s145 + $0x78] sm:$0xf]
        %v325 = vld [vmem:[%s145 + $0x7c] sm:$0x1]
        %v326 = vld [vmem:[%s145 + $0x80] sm:$0xf]
        %v327 = vld [vmem:[%s145 + $0x84] sm:$0x1]
        %v328 = vld [vmem:[%s145 + $0x88] sm:$0xf]
        %v329 = vld [vmem:[%s145 + $0x8c] sm:$0x1]
        %vm330 = vsmask.f32 3328
        %vm331 = vsmask.f32 7440
        %vm332 = vmor %vm330, %vm331
        %v334 = vshrl.u32 %v298, 16
        %v336 = vrot.slane %v334, 4
        %v337 = vshll.u32 %v298, 16
        %v339 = vrot.slane %v337, 5
        %v340 = vor.u32 %v336, %v339
        %v341 = vrot.slane %v340, 4
        %v343 = vshll.u32 %v299, 16
        %v345 = vrot.slane %v343, 5
        %v346 = vsel %vm332, %v341, %v345
        %v348 = vshrl.u32 %v300, 16
        %v350 = vrot.slane %v348, 4
        %v351 = vshll.u32 %v300, 16
        %v353 = vrot.slane %v351, 5
        %v354 = vor.u32 %v350, %v353
        %v355 = vrot.slane %v354, 4
        %v357 = vshll.u32 %v301, 16
        %v359 = vrot.slane %v357, 5
        %v360 = vsel %vm332, %v355, %v359
        %v362 = vshrl.u32 %v302, 16
        %v364 = vrot.slane %v362, 4
        %v365 = vshll.u32 %v302, 16
        %v367 = vrot.slane %v365, 5
        %v368 = vor.u32 %v364, %v367
        %v369 = vrot.slane %v368, 4
        %v371 = vshll.u32 %v303, 16
        %v373 = vrot.slane %v371, 5
        %v374 = vsel %vm332, %v369, %v373
        %v376 = vshrl.u32 %v304, 16
        %v378 = vrot.slane %v376, 4
        %v379 = vshll.u32 %v304, 16
        %v381 = vrot.slane %v379, 5
        %v382 = vor.u32 %v378, %v381
        %v383 = vrot.slane %v382, 4
        %v385 = vshll.u32 %v305, 16
        %v387 = vrot.slane %v385, 5
        %v388 = vsel %vm332, %v383, %v387
        %v390 = vshrl.u32 %v306, 16
        %v392 = vrot.slane %v390, 4
        %v393 = vshll.u32 %v306, 16
        %v395 = vrot.slane %v393, 5
        %v396 = vor.u32 %v392, %v395
        %v397 = vrot.slane %v396, 4
        %v399 = vshll.u32 %v307, 16
        %v401 = vrot.slane %v399, 5
        %v402 = vsel %vm332, %v397, %v401
        %v404 = vshrl.u32 %v308, 16
        %v406 = vrot.slane %v404, 4
        %v407 = vshll.u32 %v308, 16
        %v409 = vrot.slane %v407, 5
        %v410 = vor.u32 %v406, %v409
        %v411 = vrot.slane %v410, 4
        %v413 = vshll.u32 %v309, 16
        %v415 = vrot.slane %v413, 5
        %v416 = vsel %vm332, %v411, %v415
        %v418 = vshrl.u32 %v310, 16
        %v420 = vrot.slane %v418, 4
        %v421 = vshll.u32 %v310, 16
        %v423 = vrot.slane %v421, 5
        %v424 = vor.u32 %v420, %v423
        %v425 = vrot.slane %v424, 4
        %v427 = vshll.u32 %v311, 16
        %v429 = vrot.slane %v427, 5
        %v430 = vsel %vm332, %v425, %v429
        %v432 = vshrl.u32 %v312, 16
        %v434 = vrot.slane %v432, 4
        %v435 = vshll.u32 %v312, 16
        %v437 = vrot.slane %v435, 5
        %v438 = vor.u32 %v434, %v437
        %v439 = vrot.slane %v438, 4
        %v441 = vshll.u32 %v313, 16
        %v443 = vrot.slane %v441, 5
        %v444 = vsel %vm332, %v439, %v443
        %v446 = vshrl.u32 %v314, 16
        %v448 = vrot.slane %v446, 4
        %v449 = vshll.u32 %v314, 16
        %v451 = vrot.slane %v449, 5
        %v452 = vor.u32 %v448, %v451
        %v453 = vrot.slane %v452, 4
        %v455 = vshll.u32 %v315, 16
        %v457 = vrot.slane %v455, 5
        %v458 = vsel %vm332, %v453, %v457
        %v460 = vshrl.u32 %v316, 16
        %v462 = vrot.slane %v460, 4
        %v463 = vshll.u32 %v316, 16
        %v465 = vrot.slane %v463, 5
        %v466 = vor.u32 %v462, %v465
        %v467 = vrot.slane %v466, 4
        %v469 = vshll.u32 %v317, 16
        %v471 = vrot.slane %v469, 5
        %v472 = vsel %vm332, %v467, %v471
        %v474 = vshrl.u32 %v318, 16
        %v476 = vrot.slane %v474, 4
        %v477 = vshll.u32 %v318, 16
        %v479 = vrot.slane %v477, 5
        %v480 = vor.u32 %v476, %v479
        %v481 = vrot.slane %v480, 4
        %v483 = vshll.u32 %v319, 16
        %v485 = vrot.slane %v483, 5
        %v486 = vsel %vm332, %v481, %v485
        %v488 = vshrl.u32 %v320, 16
        %v490 = vrot.slane %v488, 4
        %v491 = vshll.u32 %v320, 16
        %v493 = vrot.slane %v491, 5
        %v494 = vor.u32 %v490, %v493
        %v495 = vrot.slane %v494, 4
        %v497 = vshll.u32 %v321, 16
        %v499 = vrot.slane %v497, 5
        %v500 = vsel %vm332, %v495, %v499
        %v502 = vshrl.u32 %v322, 16
        %v504 = vrot.slane %v502, 4
        %v505 = vshll.u32 %v322, 16
        %v507 = vrot.slane %v505, 5
        %v508 = vor.u32 %v504, %v507
        %v509 = vrot.slane %v508, 4
        %v511 = vshll.u32 %v323, 16
        %v513 = vrot.slane %v511, 5
        %v514 = vsel %vm332, %v509, %v513
        %v516 = vshrl.u32 %v324, 16
        %v518 = vrot.slane %v516, 4
        %v519 = vshll.u32 %v324, 16
        %v521 = vrot.slane %v519, 5
        %v522 = vor.u32 %v518, %v521
        %v523 = vrot.slane %v522, 4
        %v525 = vshll.u32 %v325, 16
        %v527 = vrot.slane %v525, 5
        %v528 = vsel %vm332, %v523, %v527
        %v530 = vshrl.u32 %v326, 16
        %v532 = vrot.slane %v530, 4
        %v533 = vshll.u32 %v326, 16
        %v535 = vrot.slane %v533, 5
        %v536 = vor.u32 %v532, %v535
        %v537 = vrot.slane %v536, 4
        %v539 = vshll.u32 %v327, 16
        %v541 = vrot.slane %v539, 5
        %v542 = vsel %vm332, %v537, %v541
        %v544 = vshrl.u32 %v328, 16
        %v546 = vrot.slane %v544, 4
        %v547 = vshll.u32 %v328, 16
        %v549 = vrot.slane %v547, 5
        %v550 = vor.u32 %v546, %v549
        %v551 = vrot.slane %v550, 4
        %v553 = vshll.u32 %v329, 16
        %v555 = vrot.slane %v553, 5
        %v556 = vsel %vm332, %v551, %v555
        %v573 = vunpack.c.l.bf16 %v346
        %v574 = vunpack.c.l.bf16 %v360
        %v575 = vunpack.c.l.bf16 %v374
        %v576 = vunpack.c.l.bf16 %v388
        %v577 = vunpack.c.l.bf16 %v402
        %v578 = vunpack.c.l.bf16 %v416
        %v579 = vunpack.c.l.bf16 %v430
        %v580 = vunpack.c.l.bf16 %v444
        %v581 = vunpack.c.l.bf16 %v458
        %v582 = vunpack.c.l.bf16 %v472
        %v583 = vunpack.c.l.bf16 %v486
        %v584 = vunpack.c.l.bf16 %v500
        %v585 = vunpack.c.l.bf16 %v514
        %v586 = vunpack.c.l.bf16 %v528
        %v587 = vunpack.c.l.bf16 %v542
        %v588 = vunpack.c.l.bf16 %v556
        %s589 = scalar_lea.vmem %s1, 1
        %v590 = vld [vmem:[%s589] sm:$0x1]
        %v591 = vunpack.c.l.bf16 %v590
        %593 = vset.pattern.permute.xlu0 0
        %594 = vperm.xlu0 %593, %v573
        %v595 = vpop.permute.xlu0 %594
        %598 = vset.pattern.permute.xlu0 0
        %599 = vperm.xlu0 %598, %v574
        %v600 = vpop.permute.xlu0 %599
        %603 = vset.pattern.permute.xlu0 0
        %604 = vperm.xlu0 %603, %v575
        %v605 = vpop.permute.xlu0 %604
        %608 = vset.pattern.permute.xlu0 0
        %609 = vperm.xlu0 %608, %v576
        %v610 = vpop.permute.xlu0 %609
        %613 = vset.pattern.permute.xlu0 0
        %614 = vperm.xlu0 %613, %v577
        %v615 = vpop.permute.xlu0 %614
        %618 = vset.pattern.permute.xlu0 0
        %619 = vperm.xlu0 %618, %v578
        %v620 = vpop.permute.xlu0 %619
        %623 = vset.pattern.permute.xlu0 0
        %624 = vperm.xlu0 %623, %v579
        %v625 = vpop.permute.xlu0 %624
        %628 = vset.pattern.permute.xlu0 0
        %629 = vperm.xlu0 %628, %v580
        %v630 = vpop.permute.xlu0 %629
        %633 = vset.pattern.permute.xlu0 0
        %634 = vperm.xlu0 %633, %v581
        %v635 = vpop.permute.xlu0 %634
        %638 = vset.pattern.permute.xlu0 0
        %639 = vperm.xlu0 %638, %v582
        %v640 = vpop.permute.xlu0 %639
        %643 = vset.pattern.permute.xlu0 0
        %644 = vperm.xlu0 %643, %v583
        %v645 = vpop.permute.xlu0 %644
        %648 = vset.pattern.permute.xlu0 0
        %649 = vperm.xlu0 %648, %v584
        %v650 = vpop.permute.xlu0 %649
        %653 = vset.pattern.permute.xlu0 0
        %654 = vperm.xlu0 %653, %v585
        %v655 = vpop.permute.xlu0 %654
        %658 = vset.pattern.permute.xlu0 0
        %659 = vperm.xlu0 %658, %v586
        %v660 = vpop.permute.xlu0 %659
        %663 = vset.pattern.permute.xlu0 0
        %664 = vperm.xlu0 %663, %v587
        %v665 = vpop.permute.xlu0 %664
        %668 = vset.pattern.permute.xlu0 0
        %669 = vperm.xlu0 %668, %v588
        %v670 = vpop.permute.xlu0 %669
        %v672 = vlaneseq
        %v673 = vshrl.u32 %v672, 7
        %v674 = vsub.s32 0, %v673
        %v675 = vrot.slane %v591, %v674
        %v676 = vmul.f32 %v595, %v675
        %v677 = vmul.f32 %v600, %v675
        %v678 = vmul.f32 %v605, %v675
        %v679 = vmul.f32 %v610, %v675
        %v680 = vmul.f32 %v615, %v675
        %v681 = vmul.f32 %v620, %v675
        %v682 = vmul.f32 %v625, %v675
        %v683 = vmul.f32 %v630, %v675
        %v684 = vmul.f32 %v635, %v675
        %v685 = vmul.f32 %v640, %v675
        %v686 = vmul.f32 %v645, %v675
        %v687 = vmul.f32 %v650, %v675
        %v688 = vmul.f32 %v655, %v675
        %v689 = vmul.f32 %v660, %v675
        %v690 = vmul.f32 %v665, %v675
        %v691 = vmul.f32 %v670, %v675
        %v692 = vadd.f32 %v282, %v676
        %v693 = vadd.f32 %v283, %v677
        %v694 = vadd.f32 %v284, %v678
        %v695 = vadd.f32 %v285, %v679
        %v696 = vadd.f32 %v286, %v680
        %v697 = vadd.f32 %v287, %v681
        %v698 = vadd.f32 %v288, %v682
        %v699 = vadd.f32 %v289, %v683
        %v700 = vadd.f32 %v290, %v684
        %v701 = vadd.f32 %v291, %v685
        %v702 = vadd.f32 %v292, %v686
        %v703 = vadd.f32 %v293, %v687
        %v704 = vadd.f32 %v294, %v688
        %v705 = vadd.f32 %v295, %v689
        %v706 = vadd.f32 %v296, %v690
        %v707 = vadd.f32 %v297, %v691
        %v708 = vld [vmem:[%s145] sm:$0xe]
        %v709 = vld [vmem:[%s145 + $0x8] sm:$0xe]
        %v710 = vld [vmem:[%s145 + $0x10] sm:$0xe]
        %v711 = vld [vmem:[%s145 + $0x18] sm:$0xe]
        %v712 = vld [vmem:[%s145 + $0x20] sm:$0xe]
        %v713 = vld [vmem:[%s145 + $0x28] sm:$0xe]
        %v714 = vld [vmem:[%s145 + $0x30] sm:$0xe]
        %v715 = vld [vmem:[%s145 + $0x38] sm:$0xe]
        %v716 = vld [vmem:[%s145 + $0x50] sm:$0xe]
        %v717 = vld [vmem:[%s145 + $0x58] sm:$0xe]
        %v718 = vld [vmem:[%s145 + $0x60] sm:$0xe]
        %v719 = vld [vmem:[%s145 + $0x68] sm:$0xe]
        %v720 = vld [vmem:[%s145 + $0x70] sm:$0xe]
        %v721 = vld [vmem:[%s145 + $0x78] sm:$0xe]
        %v722 = vld [vmem:[%s145 + $0x80] sm:$0xe]
        %v723 = vld [vmem:[%s145 + $0x88] sm:$0xe]
        %vm756 = vcmask 1042432
        %vm757 = vcmask 1046532
        %vm758 = vmor %vm756, %vm757
        %v759 = vrot.slane %v708, 5
        %v760 = vrot.slane %v759, 4
        %v761 = vrot.slane %v299, 5
        %v762 = vsel %vm758, %v760, %v761
        %v763 = vrot.slane %v709, 5
        %v764 = vrot.slane %v763, 4
        %v765 = vrot.slane %v301, 5
        %v766 = vsel %vm758, %v764, %v765
        %v767 = vrot.slane %v710, 5
        %v768 = vrot.slane %v767, 4
        %v769 = vrot.slane %v303, 5
        %v770 = vsel %vm758, %v768, %v769
        %v771 = vrot.slane %v711, 5
        %v772 = vrot.slane %v771, 4
        %v773 = vrot.slane %v305, 5
        %v774 = vsel %vm758, %v772, %v773
        %v775 = vrot.slane %v712, 5
        %v776 = vrot.slane %v775, 4
        %v777 = vrot.slane %v307, 5
        %v778 = vsel %vm758, %v776, %v777
        %v779 = vrot.slane %v713, 5
        %v780 = vrot.slane %v779, 4
        %v781 = vrot.slane %v309, 5
        %v782 = vsel %vm758, %v780, %v781
        %v783 = vrot.slane %v714, 5
        %v784 = vrot.slane %v783, 4
        %v785 = vrot.slane %v311, 5
        %v786 = vsel %vm758, %v784, %v785
        %v787 = vrot.slane %v715, 5
        %v788 = vrot.slane %v787, 4
        %v789 = vrot.slane %v313, 5
        %v790 = vsel %vm758, %v788, %v789
        %v791 = vrot.slane %v716, 5
        %v792 = vrot.slane %v791, 4
        %v793 = vrot.slane %v315, 5
        %v794 = vsel %vm758, %v792, %v793
        %v795 = vrot.slane %v717, 5
        %v796 = vrot.slane %v795, 4
        %v797 = vrot.slane %v317, 5
        %v798 = vsel %vm758, %v796, %v797
        %v799 = vrot.slane %v718, 5
        %v800 = vrot.slane %v799, 4
        %v801 = vrot.slane %v319, 5
        %v802 = vsel %vm758, %v800, %v801
        %v803 = vrot.slane %v719, 5
        %v804 = vrot.slane %v803, 4
        %v805 = vrot.slane %v321, 5
        %v806 = vsel %vm758, %v804, %v805
        %v807 = vrot.slane %v720, 5
        %v808 = vrot.slane %v807, 4
        %v809 = vrot.slane %v323, 5
        %v810 = vsel %vm758, %v808, %v809
        %v811 = vrot.slane %v721, 5
        %v812 = vrot.slane %v811, 4
        %v813 = vrot.slane %v325, 5
        %v814 = vsel %vm758, %v812, %v813
        %v815 = vrot.slane %v722, 5
        %v816 = vrot.slane %v815, 4
        %v817 = vrot.slane %v327, 5
        %v818 = vsel %vm758, %v816, %v817
        %v819 = vrot.slane %v723, 5
        %v820 = vrot.slane %v819, 4
        %v821 = vrot.slane %v329, 5
        %v822 = vsel %vm758, %v820, %v821
        %v839 = vunpack.c.l.bf16 %v762
        %v840 = vunpack.c.l.bf16 %v766
        %v841 = vunpack.c.l.bf16 %v770
        %v842 = vunpack.c.l.bf16 %v774
        %v843 = vunpack.c.l.bf16 %v778
        %v844 = vunpack.c.l.bf16 %v782
        %v845 = vunpack.c.l.bf16 %v786
        %v846 = vunpack.c.l.bf16 %v790
        %v847 = vunpack.c.l.bf16 %v794
        %v848 = vunpack.c.l.bf16 %v798
        %v849 = vunpack.c.l.bf16 %v802
        %v850 = vunpack.c.l.bf16 %v806
        %v851 = vunpack.c.l.bf16 %v810
        %v852 = vunpack.c.l.bf16 %v814
        %v853 = vunpack.c.l.bf16 %v818
        %v854 = vunpack.c.l.bf16 %v822
        %s855 = scalar_lea.vmem %s1, 2
        %v856 = vld [vmem:[%s855] sm:$0x1]
        %v857 = vunpack.c.l.bf16 %v856
        %859 = vset.pattern.permute.xlu0 0
        %860 = vperm.xlu0 %859, %v839
        %v861 = vpop.permute.xlu0 %860
        %864 = vset.pattern.permute.xlu0 0
        %865 = vperm.xlu0 %864, %v840
        %v866 = vpop.permute.xlu0 %865
        %869 = vset.pattern.permute.xlu0 0
        %870 = vperm.xlu0 %869, %v841
        %v871 = vpop.permute.xlu0 %870
        %874 = vset.pattern.permute.xlu0 0
        %875 = vperm.xlu0 %874, %v842
        %v876 = vpop.permute.xlu0 %875
        %879 = vset.pattern.permute.xlu0 0
        %880 = vperm.xlu0 %879, %v843
        %v881 = vpop.permute.xlu0 %880
        %884 = vset.pattern.permute.xlu0 0
        %885 = vperm.xlu0 %884, %v844
        %v886 = vpop.permute.xlu0 %885
        %889 = vset.pattern.permute.xlu0 0
        %890 = vperm.xlu0 %889, %v845
        %v891 = vpop.permute.xlu0 %890
        %894 = vset.pattern.permute.xlu0 0
        %895 = vperm.xlu0 %894, %v846
        %v896 = vpop.permute.xlu0 %895
        %899 = vset.pattern.permute.xlu0 0
        %900 = vperm.xlu0 %899, %v847
        %v901 = vpop.permute.xlu0 %900
        %904 = vset.pattern.permute.xlu0 0
        %905 = vperm.xlu0 %904, %v848
        %v906 = vpop.permute.xlu0 %905
        %909 = vset.pattern.permute.xlu0 0
        %910 = vperm.xlu0 %909, %v849
        %v911 = vpop.permute.xlu0 %910
        %914 = vset.pattern.permute.xlu0 0
        %915 = vperm.xlu0 %914, %v850
        %v916 = vpop.permute.xlu0 %915
        %919 = vset.pattern.permute.xlu0 0
        %920 = vperm.xlu0 %919, %v851
        %v921 = vpop.permute.xlu0 %920
        %924 = vset.pattern.permute.xlu0 0
        %925 = vperm.xlu0 %924, %v852
        %v926 = vpop.permute.xlu0 %925
        %929 = vset.pattern.permute.xlu0 0
        %930 = vperm.xlu0 %929, %v853
        %v931 = vpop.permute.xlu0 %930
        %934 = vset.pattern.permute.xlu0 0
        %935 = vperm.xlu0 %934, %v854
        %v936 = vpop.permute.xlu0 %935
        %v938 = vlaneseq
        %v939 = vshrl.u32 %v938, 7
        %v940 = vsub.s32 0, %v939
        %v941 = vrot.slane %v857, %v940
        %v942 = vmul.f32 %v861, %v941
        %v943 = vmul.f32 %v866, %v941
        %v944 = vmul.f32 %v871, %v941
        %v945 = vmul.f32 %v876, %v941
        %v946 = vmul.f32 %v881, %v941
        %v947 = vmul.f32 %v886, %v941
        %v948 = vmul.f32 %v891, %v941
        %v949 = vmul.f32 %v896, %v941
        %v950 = vmul.f32 %v901, %v941
        %v951 = vmul.f32 %v906, %v941
        %v952 = vmul.f32 %v911, %v941
        %v953 = vmul.f32 %v916, %v941
        %v954 = vmul.f32 %v921, %v941
        %v955 = vmul.f32 %v926, %v941
        %v956 = vmul.f32 %v931, %v941
        %v957 = vmul.f32 %v936, %v941
        %v958 = vadd.f32 %v692, %v942
        %v959 = vadd.f32 %v693, %v943
        %v960 = vadd.f32 %v694, %v944
        %v961 = vadd.f32 %v695, %v945
        %v962 = vadd.f32 %v696, %v946
        %v963 = vadd.f32 %v697, %v947
        %v964 = vadd.f32 %v698, %v948
        %v965 = vadd.f32 %v699, %v949
        %v966 = vadd.f32 %v700, %v950
        %v967 = vadd.f32 %v701, %v951
        %v968 = vadd.f32 %v702, %v952
        %v969 = vadd.f32 %v703, %v953
        %v970 = vadd.f32 %v704, %v954
        %v971 = vadd.f32 %v705, %v955
        %v972 = vadd.f32 %v706, %v956
        %v973 = vadd.f32 %v707, %v957
        %s974 = scalar_lea.vmem %s145, 8
        %v975 = vld [vmem:[%s974] sm:$0xf]
        %v976 = vld [vmem:[%s974 + $0x8] sm:$0xf]
        %v977 = vld [vmem:[%s974 + $0x10] sm:$0xf]
        %v978 = vld [vmem:[%s974 + $0x18] sm:$0xf]
        %v979 = vld [vmem:[%s974 + $0x20] sm:$0xf]
        %v980 = vld [vmem:[%s974 + $0x28] sm:$0xf]
        %v981 = vld [vmem:[%s974 + $0x30] sm:$0xf]
        %v982 = vld [vmem:[%s974 + $0x38] sm:$0xf]
        %v983 = vld [vmem:[%s974 + $0x50] sm:$0xf]
        %v984 = vld [vmem:[%s974 + $0x58] sm:$0xf]
        %v985 = vld [vmem:[%s974 + $0x60] sm:$0xf]
        %v986 = vld [vmem:[%s974 + $0x68] sm:$0xf]
        %v987 = vld [vmem:[%s974 + $0x70] sm:$0xf]
        %v988 = vld [vmem:[%s974 + $0x78] sm:$0xf]
        %v989 = vld [vmem:[%s974 + $0x80] sm:$0xf]
        %v990 = vld [vmem:[%s974 + $0x88] sm:$0xf]
        %v991 = vunpack.c.l.bf16 %v975
        %v992 = vunpack.c.l.bf16 %v976
        %v993 = vunpack.c.l.bf16 %v977
        %v994 = vunpack.c.l.bf16 %v978
        %v995 = vunpack.c.l.bf16 %v979
        %v996 = vunpack.c.l.bf16 %v980
        %v997 = vunpack.c.l.bf16 %v981
        %v998 = vunpack.c.l.bf16 %v982
        %v999 = vunpack.c.l.bf16 %v983
        %v1000 = vunpack.c.l.bf16 %v984
        %v1001 = vunpack.c.l.bf16 %v985
        %v1002 = vunpack.c.l.bf16 %v986
        %v1003 = vunpack.c.l.bf16 %v987
        %v1004 = vunpack.c.l.bf16 %v988
        %v1005 = vunpack.c.l.bf16 %v989
        %v1006 = vunpack.c.l.bf16 %v990
        %s1007 = scalar_lea.vmem %s1, 3
        %v1008 = vld [vmem:[%s1007] sm:$0x1]
        %v1009 = vunpack.c.l.bf16 %v1008
        %1011 = vset.pattern.permute.xlu0 0
        %1012 = vperm.xlu0 %1011, %v991
        %v1013 = vpop.permute.xlu0 %1012
        %1016 = vset.pattern.permute.xlu0 0
        %1017 = vperm.xlu0 %1016, %v992
        %v1018 = vpop.permute.xlu0 %1017
        %1021 = vset.pattern.permute.xlu0 0
        %1022 = vperm.xlu0 %1021, %v993
        %v1023 = vpop.permute.xlu0 %1022
        %1026 = vset.pattern.permute.xlu0 0
        %1027 = vperm.xlu0 %1026, %v994
        %v1028 = vpop.permute.xlu0 %1027
        %1031 = vset.pattern.permute.xlu0 0
        %1032 = vperm.xlu0 %1031, %v995
        %v1033 = vpop.permute.xlu0 %1032
        %1036 = vset.pattern.permute.xlu0 0
        %1037 = vperm.xlu0 %1036, %v996
        %v1038 = vpop.permute.xlu0 %1037
        %1041 = vset.pattern.permute.xlu0 0
        %1042 = vperm.xlu0 %1041, %v997
        %v1043 = vpop.permute.xlu0 %1042
        %1046 = vset.pattern.permute.xlu0 0
        %1047 = vperm.xlu0 %1046, %v998
        %v1048 = vpop.permute.xlu0 %1047
        %1051 = vset.pattern.permute.xlu0 0
        %1052 = vperm.xlu0 %1051, %v999
        %v1053 = vpop.permute.xlu0 %1052
        %1056 = vset.pattern.permute.xlu0 0
        %1057 = vperm.xlu0 %1056, %v1000
        %v1058 = vpop.permute.xlu0 %1057
        %1061 = vset.pattern.permute.xlu0 0
        %1062 = vperm.xlu0 %1061, %v1001
        %v1063 = vpop.permute.xlu0 %1062
        %1066 = vset.pattern.permute.xlu0 0
        %1067 = vperm.xlu0 %1066, %v1002
        %v1068 = vpop.permute.xlu0 %1067
        %1071 = vset.pattern.permute.xlu0 0
        %1072 = vperm.xlu0 %1071, %v1003
        %v1073 = vpop.permute.xlu0 %1072
        %1076 = vset.pattern.permute.xlu0 0
        %1077 = vperm.xlu0 %1076, %v1004
        %v1078 = vpop.permute.xlu0 %1077
        %1081 = vset.pattern.permute.xlu0 0
        %1082 = vperm.xlu0 %1081, %v1005
        %v1083 = vpop.permute.xlu0 %1082
        %1086 = vset.pattern.permute.xlu0 0
        %1087 = vperm.xlu0 %1086, %v1006
        %v1088 = vpop.permute.xlu0 %1087
        %v1090 = vlaneseq
        %v1091 = vshrl.u32 %v1090, 7
        %v1092 = vsub.s32 0, %v1091
        %v1093 = vrot.slane %v1009, %v1092
        %v1094 = vmul.f32 %v1013, %v1093
        %v1095 = vmul.f32 %v1018, %v1093
        %v1096 = vmul.f32 %v1023, %v1093
        %v1097 = vmul.f32 %v1028, %v1093
        %v1098 = vmul.f32 %v1033, %v1093
        %v1099 = vmul.f32 %v1038, %v1093
        %v1100 = vmul.f32 %v1043, %v1093
        %v1101 = vmul.f32 %v1048, %v1093
        %v1102 = vmul.f32 %v1053, %v1093
        %v1103 = vmul.f32 %v1058, %v1093
        %v1104 = vmul.f32 %v1063, %v1093
        %v1105 = vmul.f32 %v1068, %v1093
        %v1106 = vmul.f32 %v1073, %v1093
        %v1107 = vmul.f32 %v1078, %v1093
        %v1108 = vmul.f32 %v1083, %v1093
        %v1109 = vmul.f32 %v1088, %v1093
        %v1110 = vadd.f32 %v958, %v1094
        %v1111 = vadd.f32 %v959, %v1095
        %v1112 = vadd.f32 %v960, %v1096
        %v1113 = vadd.f32 %v961, %v1097
        %v1114 = vadd.f32 %v962, %v1098
        %v1115 = vadd.f32 %v963, %v1099
        %v1116 = vadd.f32 %v964, %v1100
        %v1117 = vadd.f32 %v965, %v1101
        %v1118 = vadd.f32 %v966, %v1102
        %v1119 = vadd.f32 %v967, %v1103
        %v1120 = vadd.f32 %v968, %v1104
        %v1121 = vadd.f32 %v969, %v1105
        %v1122 = vadd.f32 %v970, %v1106
        %v1123 = vadd.f32 %v971, %v1107
        %v1124 = vadd.f32 %v972, %v1108
        %v1125 = vadd.f32 %v973, %v1109
        %v1126 = vld [vmem:[%s974] sm:$0xf]
        %v1127 = vld [vmem:[%s974 + $0x4] sm:$0x1]
        %v1128 = vld [vmem:[%s974 + $0x8] sm:$0xf]
        %v1129 = vld [vmem:[%s974 + $0xc] sm:$0x1]
        %v1130 = vld [vmem:[%s974 + $0x10] sm:$0xf]
        %v1131 = vld [vmem:[%s974 + $0x14] sm:$0x1]
        %v1132 = vld [vmem:[%s974 + $0x18] sm:$0xf]
        %v1133 = vld [vmem:[%s974 + $0x1c] sm:$0x1]
        %v1134 = vld [vmem:[%s974 + $0x20] sm:$0xf]
        %v1135 = vld [vmem:[%s974 + $0x24] sm:$0x1]
        %v1136 = vld [vmem:[%s974 + $0x28] sm:$0xf]
        %v1137 = vld [vmem:[%s974 + $0x2c] sm:$0x1]
        %v1138 = vld [vmem:[%s974 + $0x30] sm:$0xf]
        %v1139 = vld [vmem:[%s974 + $0x34] sm:$0x1]
        %v1140 = vld [vmem:[%s974 + $0x38] sm:$0xf]
        %v1141 = vld [vmem:[%s974 + $0x3c] sm:$0x1]
        %v1142 = vld [vmem:[%s974 + $0x50] sm:$0xf]
        %v1143 = vld [vmem:[%s974 + $0x54] sm:$0x1]
        %v1144 = vld [vmem:[%s974 + $0x58] sm:$0xf]
        %v1145 = vld [vmem:[%s974 + $0x5c] sm:$0x1]
        %v1146 = vld [vmem:[%s974 + $0x60] sm:$0xf]
        %v1147 = vld [vmem:[%s974 + $0x64] sm:$0x1]
        %v1148 = vld [vmem:[%s974 + $0x68] sm:$0xf]
        %v1149 = vld [vmem:[%s974 + $0x6c] sm:$0x1]
        %v1150 = vld [vmem:[%s974 + $0x70] sm:$0xf]
        %v1151 = vld [vmem:[%s974 + $0x74] sm:$0x1]
        %v1152 = vld [vmem:[%s974 + $0x78] sm:$0xf]
        %v1153 = vld [vmem:[%s974 + $0x7c] sm:$0x1]
        %v1154 = vld [vmem:[%s974 + $0x80] sm:$0xf]
        %v1155 = vld [vmem:[%s974 + $0x84] sm:$0x1]
        %v1156 = vld [vmem:[%s974 + $0x88] sm:$0xf]
        %v1157 = vld [vmem:[%s974 + $0x8c] sm:$0x1]
        %v1159 = vshrl.u32 %v1126, 16
        %v1161 = vrot.slane %v1159, 4
        %v1162 = vshll.u32 %v1126, 16
        %v1164 = vrot.slane %v1162, 5
        %v1165 = vor.u32 %v1161, %v1164
        %v1166 = vrot.slane %v1165, 4
        %v1168 = vshll.u32 %v1127, 16
        %v1170 = vrot.slane %v1168, 5
        %v1171 = vsel %vm332, %v1166, %v1170
        %v1173 = vshrl.u32 %v1128, 16
        %v1175 = vrot.slane %v1173, 4
        %v1176 = vshll.u32 %v1128, 16
        %v1178 = vrot.slane %v1176, 5
        %v1179 = vor.u32 %v1175, %v1178
        %v1180 = vrot.slane %v1179, 4
        %v1182 = vshll.u32 %v1129, 16
        %v1184 = vrot.slane %v1182, 5
        %v1185 = vsel %vm332, %v1180, %v1184
        %v1187 = vshrl.u32 %v1130, 16
        %v1189 = vrot.slane %v1187, 4
        %v1190 = vshll.u32 %v1130, 16
        %v1192 = vrot.slane %v1190, 5
        %v1193 = vor.u32 %v1189, %v1192
        %v1194 = vrot.slane %v1193, 4
        %v1196 = vshll.u32 %v1131, 16
        %v1198 = vrot.slane %v1196, 5
        %v1199 = vsel %vm332, %v1194, %v1198
        %v1201 = vshrl.u32 %v1132, 16
        %v1203 = vrot.slane %v1201, 4
        %v1204 = vshll.u32 %v1132, 16
        %v1206 = vrot.slane %v1204, 5
        %v1207 = vor.u32 %v1203, %v1206
        %v1208 = vrot.slane %v1207, 4
        %v1210 = vshll.u32 %v1133, 16
        %v1212 = vrot.slane %v1210, 5
        %v1213 = vsel %vm332, %v1208, %v1212
        %v1215 = vshrl.u32 %v1134, 16
        %v1217 = vrot.slane %v1215, 4
        %v1218 = vshll.u32 %v1134, 16
        %v1220 = vrot.slane %v1218, 5
        %v1221 = vor.u32 %v1217, %v1220
        %v1222 = vrot.slane %v1221, 4
        %v1224 = vshll.u32 %v1135, 16
        %v1226 = vrot.slane %v1224, 5
        %v1227 = vsel %vm332, %v1222, %v1226
        %v1229 = vshrl.u32 %v1136, 16
        %v1231 = vrot.slane %v1229, 4
        %v1232 = vshll.u32 %v1136, 16
        %v1234 = vrot.slane %v1232, 5
        %v1235 = vor.u32 %v1231, %v1234
        %v1236 = vrot.slane %v1235, 4
        %v1238 = vshll.u32 %v1137, 16
        %v1240 = vrot.slane %v1238, 5
        %v1241 = vsel %vm332, %v1236, %v1240
        %v1243 = vshrl.u32 %v1138, 16
        %v1245 = vrot.slane %v1243, 4
        %v1246 = vshll.u32 %v1138, 16
        %v1248 = vrot.slane %v1246, 5
        %v1249 = vor.u32 %v1245, %v1248
        %v1250 = vrot.slane %v1249, 4
        %v1252 = vshll.u32 %v1139, 16
        %v1254 = vrot.slane %v1252, 5
        %v1255 = vsel %vm332, %v1250, %v1254
        %v1257 = vshrl.u32 %v1140, 16
        %v1259 = vrot.slane %v1257, 4
        %v1260 = vshll.u32 %v1140, 16
        %v1262 = vrot.slane %v1260, 5
        %v1263 = vor.u32 %v1259, %v1262
        %v1264 = vrot.slane %v1263, 4
        %v1266 = vshll.u32 %v1141, 16
        %v1268 = vrot.slane %v1266, 5
        %v1269 = vsel %vm332, %v1264, %v1268
        %v1271 = vshrl.u32 %v1142, 16
        %v1273 = vrot.slane %v1271, 4
        %v1274 = vshll.u32 %v1142, 16
        %v1276 = vrot.slane %v1274, 5
        %v1277 = vor.u32 %v1273, %v1276
        %v1278 = vrot.slane %v1277, 4
        %v1280 = vshll.u32 %v1143, 16
        %v1282 = vrot.slane %v1280, 5
        %v1283 = vsel %vm332, %v1278, %v1282
        %v1285 = vshrl.u32 %v1144, 16
        %v1287 = vrot.slane %v1285, 4
        %v1288 = vshll.u32 %v1144, 16
        %v1290 = vrot.slane %v1288, 5
        %v1291 = vor.u32 %v1287, %v1290
        %v1292 = vrot.slane %v1291, 4
        %v1294 = vshll.u32 %v1145, 16
        %v1296 = vrot.slane %v1294, 5
        %v1297 = vsel %vm332, %v1292, %v1296
        %v1299 = vshrl.u32 %v1146, 16
        %v1301 = vrot.slane %v1299, 4
        %v1302 = vshll.u32 %v1146, 16
        %v1304 = vrot.slane %v1302, 5
        %v1305 = vor.u32 %v1301, %v1304
        %v1306 = vrot.slane %v1305, 4
        %v1308 = vshll.u32 %v1147, 16
        %v1310 = vrot.slane %v1308, 5
        %v1311 = vsel %vm332, %v1306, %v1310
        %v1313 = vshrl.u32 %v1148, 16
        %v1315 = vrot.slane %v1313, 4
        %v1316 = vshll.u32 %v1148, 16
        %v1318 = vrot.slane %v1316, 5
        %v1319 = vor.u32 %v1315, %v1318
        %v1320 = vrot.slane %v1319, 4
        %v1322 = vshll.u32 %v1149, 16
        %v1324 = vrot.slane %v1322, 5
        %v1325 = vsel %vm332, %v1320, %v1324
        %v1327 = vshrl.u32 %v1150, 16
        %v1329 = vrot.slane %v1327, 4
        %v1330 = vshll.u32 %v1150, 16
        %v1332 = vrot.slane %v1330, 5
        %v1333 = vor.u32 %v1329, %v1332
        %v1334 = vrot.slane %v1333, 4
        %v1336 = vshll.u32 %v1151, 16
        %v1338 = vrot.slane %v1336, 5
        %v1339 = vsel %vm332, %v1334, %v1338
        %v1341 = vshrl.u32 %v1152, 16
        %v1343 = vrot.slane %v1341, 4
        %v1344 = vshll.u32 %v1152, 16
        %v1346 = vrot.slane %v1344, 5
        %v1347 = vor.u32 %v1343, %v1346
        %v1348 = vrot.slane %v1347, 4
        %v1350 = vshll.u32 %v1153, 16
        %v1352 = vrot.slane %v1350, 5
        %v1353 = vsel %vm332, %v1348, %v1352
        %v1355 = vshrl.u32 %v1154, 16
        %v1357 = vrot.slane %v1355, 4
        %v1358 = vshll.u32 %v1154, 16
        %v1360 = vrot.slane %v1358, 5
        %v1361 = vor.u32 %v1357, %v1360
        %v1362 = vrot.slane %v1361, 4
        %v1364 = vshll.u32 %v1155, 16
        %v1366 = vrot.slane %v1364, 5
        %v1367 = vsel %vm332, %v1362, %v1366
        %v1369 = vshrl.u32 %v1156, 16
        %v1371 = vrot.slane %v1369, 4
        %v1372 = vshll.u32 %v1156, 16
        %v1374 = vrot.slane %v1372, 5
        %v1375 = vor.u32 %v1371, %v1374
        %v1376 = vrot.slane %v1375, 4
        %v1378 = vshll.u32 %v1157, 16
        %v1380 = vrot.slane %v1378, 5
        %v1381 = vsel %vm332, %v1376, %v1380
        %v1398 = vunpack.c.l.bf16 %v1171
        %v1399 = vunpack.c.l.bf16 %v1185
        %v1400 = vunpack.c.l.bf16 %v1199
        %v1401 = vunpack.c.l.bf16 %v1213
        %v1402 = vunpack.c.l.bf16 %v1227
        %v1403 = vunpack.c.l.bf16 %v1241
        %v1404 = vunpack.c.l.bf16 %v1255
        %v1405 = vunpack.c.l.bf16 %v1269
        %v1406 = vunpack.c.l.bf16 %v1283
        %v1407 = vunpack.c.l.bf16 %v1297
        %v1408 = vunpack.c.l.bf16 %v1311
        %v1409 = vunpack.c.l.bf16 %v1325
        %v1410 = vunpack.c.l.bf16 %v1339
        %v1411 = vunpack.c.l.bf16 %v1353
        %v1412 = vunpack.c.l.bf16 %v1367
        %v1413 = vunpack.c.l.bf16 %v1381
        %s1414 = scalar_lea.vmem %s1, 4
        %v1415 = vld [vmem:[%s1414] sm:$0x1]
        %v1416 = vunpack.c.l.bf16 %v1415
        %1418 = vset.pattern.permute.xlu0 0
        %1419 = vperm.xlu0 %1418, %v1398
        %v1420 = vpop.permute.xlu0 %1419
        %1423 = vset.pattern.permute.xlu0 0
        %1424 = vperm.xlu0 %1423, %v1399
        %v1425 = vpop.permute.xlu0 %1424
        %1428 = vset.pattern.permute.xlu0 0
        %1429 = vperm.xlu0 %1428, %v1400
        %v1430 = vpop.permute.xlu0 %1429
        %1433 = vset.pattern.permute.xlu0 0
        %1434 = vperm.xlu0 %1433, %v1401
        %v1435 = vpop.permute.xlu0 %1434
        %1438 = vset.pattern.permute.xlu0 0
        %1439 = vperm.xlu0 %1438, %v1402
        %v1440 = vpop.permute.xlu0 %1439
        %1443 = vset.pattern.permute.xlu0 0
        %1444 = vperm.xlu0 %1443, %v1403
        %v1445 = vpop.permute.xlu0 %1444
        %1448 = vset.pattern.permute.xlu0 0
        %1449 = vperm.xlu0 %1448, %v1404
        %v1450 = vpop.permute.xlu0 %1449
        %1453 = vset.pattern.permute.xlu0 0
        %1454 = vperm.xlu0 %1453, %v1405
        %v1455 = vpop.permute.xlu0 %1454
        %1458 = vset.pattern.permute.xlu0 0
        %1459 = vperm.xlu0 %1458, %v1406
        %v1460 = vpop.permute.xlu0 %1459
        %1463 = vset.pattern.permute.xlu0 0
        %1464 = vperm.xlu0 %1463, %v1407
        %v1465 = vpop.permute.xlu0 %1464
        %1468 = vset.pattern.permute.xlu0 0
        %1469 = vperm.xlu0 %1468, %v1408
        %v1470 = vpop.permute.xlu0 %1469
        %1473 = vset.pattern.permute.xlu0 0
        %1474 = vperm.xlu0 %1473, %v1409
        %v1475 = vpop.permute.xlu0 %1474
        %1478 = vset.pattern.permute.xlu0 0
        %1479 = vperm.xlu0 %1478, %v1410
        %v1480 = vpop.permute.xlu0 %1479
        %1483 = vset.pattern.permute.xlu0 0
        %1484 = vperm.xlu0 %1483, %v1411
        %v1485 = vpop.permute.xlu0 %1484
        %1488 = vset.pattern.permute.xlu0 0
        %1489 = vperm.xlu0 %1488, %v1412
        %v1490 = vpop.permute.xlu0 %1489
        %1493 = vset.pattern.permute.xlu0 0
        %1494 = vperm.xlu0 %1493, %v1413
        %v1495 = vpop.permute.xlu0 %1494
        %v1497 = vlaneseq
        %v1498 = vshrl.u32 %v1497, 7
        %v1499 = vsub.s32 0, %v1498
        %v1500 = vrot.slane %v1416, %v1499
        %v1501 = vmul.f32 %v1420, %v1500
        %v1502 = vmul.f32 %v1425, %v1500
        %v1503 = vmul.f32 %v1430, %v1500
        %v1504 = vmul.f32 %v1435, %v1500
        %v1505 = vmul.f32 %v1440, %v1500
        %v1506 = vmul.f32 %v1445, %v1500
        %v1507 = vmul.f32 %v1450, %v1500
        %v1508 = vmul.f32 %v1455, %v1500
        %v1509 = vmul.f32 %v1460, %v1500
        %v1510 = vmul.f32 %v1465, %v1500
        %v1511 = vmul.f32 %v1470, %v1500
        %v1512 = vmul.f32 %v1475, %v1500
        %v1513 = vmul.f32 %v1480, %v1500
        %v1514 = vmul.f32 %v1485, %v1500
        %v1515 = vmul.f32 %v1490, %v1500
        %v1516 = vmul.f32 %v1495, %v1500
        %v1517 = vadd.f32 %v1110, %v1501
        %v1518 = vadd.f32 %v1111, %v1502
        %v1519 = vadd.f32 %v1112, %v1503
        %v1520 = vadd.f32 %v1113, %v1504
        %v1521 = vadd.f32 %v1114, %v1505
        %v1522 = vadd.f32 %v1115, %v1506
        %v1523 = vadd.f32 %v1116, %v1507
        %v1524 = vadd.f32 %v1117, %v1508
        %v1525 = vadd.f32 %v1118, %v1509
        %v1526 = vadd.f32 %v1119, %v1510
        %v1527 = vadd.f32 %v1120, %v1511
        %v1528 = vadd.f32 %v1121, %v1512
        %v1529 = vadd.f32 %v1122, %v1513
        %v1530 = vadd.f32 %v1123, %v1514
        %v1531 = vadd.f32 %v1124, %v1515
        %v1532 = vadd.f32 %v1125, %v1516
        %v1533 = vld [vmem:[%s974] sm:$0xe]
        %v1534 = vld [vmem:[%s974 + $0x8] sm:$0xe]
        %v1535 = vld [vmem:[%s974 + $0x10] sm:$0xe]
        %v1536 = vld [vmem:[%s974 + $0x18] sm:$0xe]
        %v1537 = vld [vmem:[%s974 + $0x20] sm:$0xe]
        %v1538 = vld [vmem:[%s974 + $0x28] sm:$0xe]
        %v1539 = vld [vmem:[%s974 + $0x30] sm:$0xe]
        %v1540 = vld [vmem:[%s974 + $0x38] sm:$0xe]
        %v1541 = vld [vmem:[%s974 + $0x50] sm:$0xe]
        %v1542 = vld [vmem:[%s974 + $0x58] sm:$0xe]
        %v1543 = vld [vmem:[%s974 + $0x60] sm:$0xe]
        %v1544 = vld [vmem:[%s974 + $0x68] sm:$0xe]
        %v1545 = vld [vmem:[%s974 + $0x70] sm:$0xe]
        %v1546 = vld [vmem:[%s974 + $0x78] sm:$0xe]
        %v1547 = vld [vmem:[%s974 + $0x80] sm:$0xe]
        %v1548 = vld [vmem:[%s974 + $0x88] sm:$0xe]
        %v1581 = vrot.slane %v1533, 5
        %v1582 = vrot.slane %v1581, 4
        %v1583 = vrot.slane %v1127, 5
        %v1584 = vsel %vm758, %v1582, %v1583
        %v1585 = vrot.slane %v1534, 5
        %v1586 = vrot.slane %v1585, 4
        %v1587 = vrot.slane %v1129, 5
        %v1588 = vsel %vm758, %v1586, %v1587
        %v1589 = vrot.slane %v1535, 5
        %v1590 = vrot.slane %v1589, 4
        %v1591 = vrot.slane %v1131, 5
        %v1592 = vsel %vm758, %v1590, %v1591
        %v1593 = vrot.slane %v1536, 5
        %v1594 = vrot.slane %v1593, 4
        %v1595 = vrot.slane %v1133, 5
        %v1596 = vsel %vm758, %v1594, %v1595
        %v1597 = vrot.slane %v1537, 5
        %v1598 = vrot.slane %v1597, 4
        %v1599 = vrot.slane %v1135, 5
        %v1600 = vsel %vm758, %v1598, %v1599
        %v1601 = vrot.slane %v1538, 5
        %v1602 = vrot.slane %v1601, 4
        %v1603 = vrot.slane %v1137, 5
        %v1604 = vsel %vm758, %v1602, %v1603
        %v1605 = vrot.slane %v1539, 5
        %v1606 = vrot.slane %v1605, 4
        %v1607 = vrot.slane %v1139, 5
        %v1608 = vsel %vm758, %v1606, %v1607
        %v1609 = vrot.slane %v1540, 5
        %v1610 = vrot.slane %v1609, 4
        %v1611 = vrot.slane %v1141, 5
        %v1612 = vsel %vm758, %v1610, %v1611
        %v1613 = vrot.slane %v1541, 5
        %v1614 = vrot.slane %v1613, 4
        %v1615 = vrot.slane %v1143, 5
        %v1616 = vsel %vm758, %v1614, %v1615
        %v1617 = vrot.slane %v1542, 5
        %v1618 = vrot.slane %v1617, 4
        %v1619 = vrot.slane %v1145, 5
        %v1620 = vsel %vm758, %v1618, %v1619
        %v1621 = vrot.slane %v1543, 5
        %v1622 = vrot.slane %v1621, 4
        %v1623 = vrot.slane %v1147, 5
        %v1624 = vsel %vm758, %v1622, %v1623
        %v1625 = vrot.slane %v1544, 5
        %v1626 = vrot.slane %v1625, 4
        %v1627 = vrot.slane %v1149, 5
        %v1628 = vsel %vm758, %v1626, %v1627
        %v1629 = vrot.slane %v1545, 5
        %v1630 = vrot.slane %v1629, 4
        %v1631 = vrot.slane %v1151, 5
        %v1632 = vsel %vm758, %v1630, %v1631
        %v1633 = vrot.slane %v1546, 5
        %v1634 = vrot.slane %v1633, 4
        %v1635 = vrot.slane %v1153, 5
        %v1636 = vsel %vm758, %v1634, %v1635
        %v1637 = vrot.slane %v1547, 5
        %v1638 = vrot.slane %v1637, 4
        %v1639 = vrot.slane %v1155, 5
        %v1640 = vsel %vm758, %v1638, %v1639
        %v1641 = vrot.slane %v1548, 5
        %v1642 = vrot.slane %v1641, 4
        %v1643 = vrot.slane %v1157, 5
        %v1644 = vsel %vm758, %v1642, %v1643
        %v1661 = vunpack.c.l.bf16 %v1584
        %v1662 = vunpack.c.l.bf16 %v1588
        %v1663 = vunpack.c.l.bf16 %v1592
        %v1664 = vunpack.c.l.bf16 %v1596
        %v1665 = vunpack.c.l.bf16 %v1600
        %v1666 = vunpack.c.l.bf16 %v1604
        %v1667 = vunpack.c.l.bf16 %v1608
        %v1668 = vunpack.c.l.bf16 %v1612
        %v1669 = vunpack.c.l.bf16 %v1616
        %v1670 = vunpack.c.l.bf16 %v1620
        %v1671 = vunpack.c.l.bf16 %v1624
        %v1672 = vunpack.c.l.bf16 %v1628
        %v1673 = vunpack.c.l.bf16 %v1632
        %v1674 = vunpack.c.l.bf16 %v1636
        %v1675 = vunpack.c.l.bf16 %v1640
        %v1676 = vunpack.c.l.bf16 %v1644
        %s1677 = scalar_lea.vmem %s1, 5
        %v1678 = vld [vmem:[%s1677] sm:$0x1]
        %v1679 = vunpack.c.l.bf16 %v1678
        %1681 = vset.pattern.permute.xlu0 0
        %1682 = vperm.xlu0 %1681, %v1661
        %v1683 = vpop.permute.xlu0 %1682
        %1686 = vset.pattern.permute.xlu0 0
        %1687 = vperm.xlu0 %1686, %v1662
        %v1688 = vpop.permute.xlu0 %1687
        %1691 = vset.pattern.permute.xlu0 0
        %1692 = vperm.xlu0 %1691, %v1663
        %v1693 = vpop.permute.xlu0 %1692
        %1696 = vset.pattern.permute.xlu0 0
        %1697 = vperm.xlu0 %1696, %v1664
        %v1698 = vpop.permute.xlu0 %1697
        %1701 = vset.pattern.permute.xlu0 0
        %1702 = vperm.xlu0 %1701, %v1665
        %v1703 = vpop.permute.xlu0 %1702
        %1706 = vset.pattern.permute.xlu0 0
        %1707 = vperm.xlu0 %1706, %v1666
        %v1708 = vpop.permute.xlu0 %1707
        %1711 = vset.pattern.permute.xlu0 0
        %1712 = vperm.xlu0 %1711, %v1667
        %v1713 = vpop.permute.xlu0 %1712
        %1716 = vset.pattern.permute.xlu0 0
        %1717 = vperm.xlu0 %1716, %v1668
        %v1718 = vpop.permute.xlu0 %1717
        %1721 = vset.pattern.permute.xlu0 0
        %1722 = vperm.xlu0 %1721, %v1669
        %v1723 = vpop.permute.xlu0 %1722
        %1726 = vset.pattern.permute.xlu0 0
        %1727 = vperm.xlu0 %1726, %v1670
        %v1728 = vpop.permute.xlu0 %1727
        %1731 = vset.pattern.permute.xlu0 0
        %1732 = vperm.xlu0 %1731, %v1671
        %v1733 = vpop.permute.xlu0 %1732
        %1736 = vset.pattern.permute.xlu0 0
        %1737 = vperm.xlu0 %1736, %v1672
        %v1738 = vpop.permute.xlu0 %1737
        %1741 = vset.pattern.permute.xlu0 0
        %1742 = vperm.xlu0 %1741, %v1673
        %v1743 = vpop.permute.xlu0 %1742
        %1746 = vset.pattern.permute.xlu0 0
        %1747 = vperm.xlu0 %1746, %v1674
        %v1748 = vpop.permute.xlu0 %1747
        %1751 = vset.pattern.permute.xlu0 0
        %1752 = vperm.xlu0 %1751, %v1675
        %v1753 = vpop.permute.xlu0 %1752
        %1756 = vset.pattern.permute.xlu0 0
        %1757 = vperm.xlu0 %1756, %v1676
        %v1758 = vpop.permute.xlu0 %1757
        %v1760 = vlaneseq
        %v1761 = vshrl.u32 %v1760, 7
        %v1762 = vsub.s32 0, %v1761
        %v1763 = vrot.slane %v1679, %v1762
        %v1764 = vmul.f32 %v1683, %v1763
        %v1765 = vmul.f32 %v1688, %v1763
        %v1766 = vmul.f32 %v1693, %v1763
        %v1767 = vmul.f32 %v1698, %v1763
        %v1768 = vmul.f32 %v1703, %v1763
        %v1769 = vmul.f32 %v1708, %v1763
        %v1770 = vmul.f32 %v1713, %v1763
        %v1771 = vmul.f32 %v1718, %v1763
        %v1772 = vmul.f32 %v1723, %v1763
        %v1773 = vmul.f32 %v1728, %v1763
        %v1774 = vmul.f32 %v1733, %v1763
        %v1775 = vmul.f32 %v1738, %v1763
        %v1776 = vmul.f32 %v1743, %v1763
        %v1777 = vmul.f32 %v1748, %v1763
        %v1778 = vmul.f32 %v1753, %v1763
        %v1779 = vmul.f32 %v1758, %v1763
        %v1780 = vadd.f32 %v1517, %v1764
        %v1781 = vadd.f32 %v1518, %v1765
        %v1782 = vadd.f32 %v1519, %v1766
        %v1783 = vadd.f32 %v1520, %v1767
        %v1784 = vadd.f32 %v1521, %v1768
        %v1785 = vadd.f32 %v1522, %v1769
        %v1786 = vadd.f32 %v1523, %v1770
        %v1787 = vadd.f32 %v1524, %v1771
        %v1788 = vadd.f32 %v1525, %v1772
        %v1789 = vadd.f32 %v1526, %v1773
        %v1790 = vadd.f32 %v1527, %v1774
        %v1791 = vadd.f32 %v1528, %v1775
        %v1792 = vadd.f32 %v1529, %v1776
        %v1793 = vadd.f32 %v1530, %v1777
        %v1794 = vadd.f32 %v1531, %v1778
        %v1795 = vadd.f32 %v1532, %v1779
        %s1796 = scalar_lea.vmem %s145, 16
        %v1797 = vld [vmem:[%s1796] sm:$0xf]
        %v1798 = vld [vmem:[%s1796 + $0x8] sm:$0xf]
        %v1799 = vld [vmem:[%s1796 + $0x10] sm:$0xf]
        %v1800 = vld [vmem:[%s1796 + $0x18] sm:$0xf]
        %v1801 = vld [vmem:[%s1796 + $0x20] sm:$0xf]
        %v1802 = vld [vmem:[%s1796 + $0x28] sm:$0xf]
        %v1803 = vld [vmem:[%s1796 + $0x30] sm:$0xf]
        %v1804 = vld [vmem:[%s1796 + $0x38] sm:$0xf]
        %v1805 = vld [vmem:[%s1796 + $0x50] sm:$0xf]
        %v1806 = vld [vmem:[%s1796 + $0x58] sm:$0xf]
        %v1807 = vld [vmem:[%s1796 + $0x60] sm:$0xf]
        %v1808 = vld [vmem:[%s1796 + $0x68] sm:$0xf]
        %v1809 = vld [vmem:[%s1796 + $0x70] sm:$0xf]
        %v1810 = vld [vmem:[%s1796 + $0x78] sm:$0xf]
        %v1811 = vld [vmem:[%s1796 + $0x80] sm:$0xf]
        %v1812 = vld [vmem:[%s1796 + $0x88] sm:$0xf]
        %v1813 = vunpack.c.l.bf16 %v1797
        %v1814 = vunpack.c.l.bf16 %v1798
        %v1815 = vunpack.c.l.bf16 %v1799
        %v1816 = vunpack.c.l.bf16 %v1800
        %v1817 = vunpack.c.l.bf16 %v1801
        %v1818 = vunpack.c.l.bf16 %v1802
        %v1819 = vunpack.c.l.bf16 %v1803
        %v1820 = vunpack.c.l.bf16 %v1804
        %v1821 = vunpack.c.l.bf16 %v1805
        %v1822 = vunpack.c.l.bf16 %v1806
        %v1823 = vunpack.c.l.bf16 %v1807
        %v1824 = vunpack.c.l.bf16 %v1808
        %v1825 = vunpack.c.l.bf16 %v1809
        %v1826 = vunpack.c.l.bf16 %v1810
        %v1827 = vunpack.c.l.bf16 %v1811
        %v1828 = vunpack.c.l.bf16 %v1812
        %s1829 = scalar_lea.vmem %s1, 6
        %v1830 = vld [vmem:[%s1829] sm:$0x1]
        %v1831 = vunpack.c.l.bf16 %v1830
        %1833 = vset.pattern.permute.xlu0 0
        %1834 = vperm.xlu0 %1833, %v1813
        %v1835 = vpop.permute.xlu0 %1834
        %1838 = vset.pattern.permute.xlu0 0
        %1839 = vperm.xlu0 %1838, %v1814
        %v1840 = vpop.permute.xlu0 %1839
        %1843 = vset.pattern.permute.xlu0 0
        %1844 = vperm.xlu0 %1843, %v1815
        %v1845 = vpop.permute.xlu0 %1844
        %1848 = vset.pattern.permute.xlu0 0
        %1849 = vperm.xlu0 %1848, %v1816
        %v1850 = vpop.permute.xlu0 %1849
        %1853 = vset.pattern.permute.xlu0 0
        %1854 = vperm.xlu0 %1853, %v1817
        %v1855 = vpop.permute.xlu0 %1854
        %1858 = vset.pattern.permute.xlu0 0
        %1859 = vperm.xlu0 %1858, %v1818
        %v1860 = vpop.permute.xlu0 %1859
        %1863 = vset.pattern.permute.xlu0 0
        %1864 = vperm.xlu0 %1863, %v1819
        %v1865 = vpop.permute.xlu0 %1864
        %1868 = vset.pattern.permute.xlu0 0
        %1869 = vperm.xlu0 %1868, %v1820
        %v1870 = vpop.permute.xlu0 %1869
        %1873 = vset.pattern.permute.xlu0 0
        %1874 = vperm.xlu0 %1873, %v1821
        %v1875 = vpop.permute.xlu0 %1874
        %1878 = vset.pattern.permute.xlu0 0
        %1879 = vperm.xlu0 %1878, %v1822
        %v1880 = vpop.permute.xlu0 %1879
        %1883 = vset.pattern.permute.xlu0 0
        %1884 = vperm.xlu0 %1883, %v1823
        %v1885 = vpop.permute.xlu0 %1884
        %1888 = vset.pattern.permute.xlu0 0
        %1889 = vperm.xlu0 %1888, %v1824
        %v1890 = vpop.permute.xlu0 %1889
        %1893 = vset.pattern.permute.xlu0 0
        %1894 = vperm.xlu0 %1893, %v1825
        %v1895 = vpop.permute.xlu0 %1894
        %1898 = vset.pattern.permute.xlu0 0
        %1899 = vperm.xlu0 %1898, %v1826
        %v1900 = vpop.permute.xlu0 %1899
        %1903 = vset.pattern.permute.xlu0 0
        %1904 = vperm.xlu0 %1903, %v1827
        %v1905 = vpop.permute.xlu0 %1904
        %1908 = vset.pattern.permute.xlu0 0
        %1909 = vperm.xlu0 %1908, %v1828
        %v1910 = vpop.permute.xlu0 %1909
        %v1912 = vlaneseq
        %v1913 = vshrl.u32 %v1912, 7
        %v1914 = vsub.s32 0, %v1913
        %v1915 = vrot.slane %v1831, %v1914
        %v1916 = vmul.f32 %v1835, %v1915
        %v1917 = vmul.f32 %v1840, %v1915
        %v1918 = vmul.f32 %v1845, %v1915
        %v1919 = vmul.f32 %v1850, %v1915
        %v1920 = vmul.f32 %v1855, %v1915
        %v1921 = vmul.f32 %v1860, %v1915
        %v1922 = vmul.f32 %v1865, %v1915
        %v1923 = vmul.f32 %v1870, %v1915
        %v1924 = vmul.f32 %v1875, %v1915
        %v1925 = vmul.f32 %v1880, %v1915
        %v1926 = vmul.f32 %v1885, %v1915
        %v1927 = vmul.f32 %v1890, %v1915
        %v1928 = vmul.f32 %v1895, %v1915
        %v1929 = vmul.f32 %v1900, %v1915
        %v1930 = vmul.f32 %v1905, %v1915
        %v1931 = vmul.f32 %v1910, %v1915
        %v1932 = vadd.f32 %v1780, %v1916
        %v1933 = vadd.f32 %v1781, %v1917
        %v1934 = vadd.f32 %v1782, %v1918
        %v1935 = vadd.f32 %v1783, %v1919
        %v1936 = vadd.f32 %v1784, %v1920
        %v1937 = vadd.f32 %v1785, %v1921
        %v1938 = vadd.f32 %v1786, %v1922
        %v1939 = vadd.f32 %v1787, %v1923
        %v1940 = vadd.f32 %v1788, %v1924
        %v1941 = vadd.f32 %v1789, %v1925
        %v1942 = vadd.f32 %v1790, %v1926
        %v1943 = vadd.f32 %v1791, %v1927
        %v1944 = vadd.f32 %v1792, %v1928
        %v1945 = vadd.f32 %v1793, %v1929
        %v1946 = vadd.f32 %v1794, %v1930
        %v1947 = vadd.f32 %v1795, %v1931
        %v1948 = vld [vmem:[%s1796] sm:$0xf]
        %v1949 = vld [vmem:[%s1796 + $0x4] sm:$0x1]
        %v1950 = vld [vmem:[%s1796 + $0x8] sm:$0xf]
        %v1951 = vld [vmem:[%s1796 + $0xc] sm:$0x1]
        %v1952 = vld [vmem:[%s1796 + $0x10] sm:$0xf]
        %v1953 = vld [vmem:[%s1796 + $0x14] sm:$0x1]
        %v1954 = vld [vmem:[%s1796 + $0x18] sm:$0xf]
        %v1955 = vld [vmem:[%s1796 + $0x1c] sm:$0x1]
        %v1956 = vld [vmem:[%s1796 + $0x20] sm:$0xf]
        %v1957 = vld [vmem:[%s1796 + $0x24] sm:$0x1]
        %v1958 = vld [vmem:[%s1796 + $0x28] sm:$0xf]
        %v1959 = vld [vmem:[%s1796 + $0x2c] sm:$0x1]
        %v1960 = vld [vmem:[%s1796 + $0x30] sm:$0xf]
        %v1961 = vld [vmem:[%s1796 + $0x34] sm:$0x1]
        %v1962 = vld [vmem:[%s1796 + $0x38] sm:$0xf]
        %v1963 = vld [vmem:[%s1796 + $0x3c] sm:$0x1]
        %v1964 = vld [vmem:[%s1796 + $0x50] sm:$0xf]
        %v1965 = vld [vmem:[%s1796 + $0x54] sm:$0x1]
        %v1966 = vld [vmem:[%s1796 + $0x58] sm:$0xf]
        %v1967 = vld [vmem:[%s1796 + $0x5c] sm:$0x1]
        %v1968 = vld [vmem:[%s1796 + $0x60] sm:$0xf]
        %v1969 = vld [vmem:[%s1796 + $0x64] sm:$0x1]
        %v1970 = vld [vmem:[%s1796 + $0x68] sm:$0xf]
        %v1971 = vld [vmem:[%s1796 + $0x6c] sm:$0x1]
        %v1972 = vld [vmem:[%s1796 + $0x70] sm:$0xf]
        %v1973 = vld [vmem:[%s1796 + $0x74] sm:$0x1]
        %v1974 = vld [vmem:[%s1796 + $0x78] sm:$0xf]
        %v1975 = vld [vmem:[%s1796 + $0x7c] sm:$0x1]
        %v1976 = vld [vmem:[%s1796 + $0x80] sm:$0xf]
        %v1977 = vld [vmem:[%s1796 + $0x84] sm:$0x1]
        %v1978 = vld [vmem:[%s1796 + $0x88] sm:$0xf]
        %v1979 = vld [vmem:[%s1796 + $0x8c] sm:$0x1]
        %v1981 = vshrl.u32 %v1948, 16
        %v1983 = vrot.slane %v1981, 4
        %v1984 = vshll.u32 %v1948, 16
        %v1986 = vrot.slane %v1984, 5
        %v1987 = vor.u32 %v1983, %v1986
        %v1988 = vrot.slane %v1987, 4
        %v1990 = vshll.u32 %v1949, 16
        %v1992 = vrot.slane %v1990, 5
        %v1993 = vsel %vm332, %v1988, %v1992
        %v1995 = vshrl.u32 %v1950, 16
        %v1997 = vrot.slane %v1995, 4
        %v1998 = vshll.u32 %v1950, 16
        %v2000 = vrot.slane %v1998, 5
        %v2001 = vor.u32 %v1997, %v2000
        %v2002 = vrot.slane %v2001, 4
        %v2004 = vshll.u32 %v1951, 16
        %v2006 = vrot.slane %v2004, 5
        %v2007 = vsel %vm332, %v2002, %v2006
        %v2009 = vshrl.u32 %v1952, 16
        %v2011 = vrot.slane %v2009, 4
        %v2012 = vshll.u32 %v1952, 16
        %v2014 = vrot.slane %v2012, 5
        %v2015 = vor.u32 %v2011, %v2014
        %v2016 = vrot.slane %v2015, 4
        %v2018 = vshll.u32 %v1953, 16
        %v2020 = vrot.slane %v2018, 5
        %v2021 = vsel %vm332, %v2016, %v2020
        %v2023 = vshrl.u32 %v1954, 16
        %v2025 = vrot.slane %v2023, 4
        %v2026 = vshll.u32 %v1954, 16
        %v2028 = vrot.slane %v2026, 5
        %v2029 = vor.u32 %v2025, %v2028
        %v2030 = vrot.slane %v2029, 4
        %v2032 = vshll.u32 %v1955, 16
        %v2034 = vrot.slane %v2032, 5
        %v2035 = vsel %vm332, %v2030, %v2034
        %v2037 = vshrl.u32 %v1956, 16
        %v2039 = vrot.slane %v2037, 4
        %v2040 = vshll.u32 %v1956, 16
        %v2042 = vrot.slane %v2040, 5
        %v2043 = vor.u32 %v2039, %v2042
        %v2044 = vrot.slane %v2043, 4
        %v2046 = vshll.u32 %v1957, 16
        %v2048 = vrot.slane %v2046, 5
        %v2049 = vsel %vm332, %v2044, %v2048
        %v2051 = vshrl.u32 %v1958, 16
        %v2053 = vrot.slane %v2051, 4
        %v2054 = vshll.u32 %v1958, 16
        %v2056 = vrot.slane %v2054, 5
        %v2057 = vor.u32 %v2053, %v2056
        %v2058 = vrot.slane %v2057, 4
        %v2060 = vshll.u32 %v1959, 16
        %v2062 = vrot.slane %v2060, 5
        %v2063 = vsel %vm332, %v2058, %v2062
        %v2065 = vshrl.u32 %v1960, 16
        %v2067 = vrot.slane %v2065, 4
        %v2068 = vshll.u32 %v1960, 16
        %v2070 = vrot.slane %v2068, 5
        %v2071 = vor.u32 %v2067, %v2070
        %v2072 = vrot.slane %v2071, 4
        %v2074 = vshll.u32 %v1961, 16
        %v2076 = vrot.slane %v2074, 5
        %v2077 = vsel %vm332, %v2072, %v2076
        %v2079 = vshrl.u32 %v1962, 16
        %v2081 = vrot.slane %v2079, 4
        %v2082 = vshll.u32 %v1962, 16
        %v2084 = vrot.slane %v2082, 5
        %v2085 = vor.u32 %v2081, %v2084
        %v2086 = vrot.slane %v2085, 4
        %v2088 = vshll.u32 %v1963, 16
        %v2090 = vrot.slane %v2088, 5
        %v2091 = vsel %vm332, %v2086, %v2090
        %v2093 = vshrl.u32 %v1964, 16
        %v2095 = vrot.slane %v2093, 4
        %v2096 = vshll.u32 %v1964, 16
        %v2098 = vrot.slane %v2096, 5
        %v2099 = vor.u32 %v2095, %v2098
        %v2100 = vrot.slane %v2099, 4
        %v2102 = vshll.u32 %v1965, 16
        %v2104 = vrot.slane %v2102, 5
        %v2105 = vsel %vm332, %v2100, %v2104
        %v2107 = vshrl.u32 %v1966, 16
        %v2109 = vrot.slane %v2107, 4
        %v2110 = vshll.u32 %v1966, 16
        %v2112 = vrot.slane %v2110, 5
        %v2113 = vor.u32 %v2109, %v2112
        %v2114 = vrot.slane %v2113, 4
        %v2116 = vshll.u32 %v1967, 16
        %v2118 = vrot.slane %v2116, 5
        %v2119 = vsel %vm332, %v2114, %v2118
        %v2121 = vshrl.u32 %v1968, 16
        %v2123 = vrot.slane %v2121, 4
        %v2124 = vshll.u32 %v1968, 16
        %v2126 = vrot.slane %v2124, 5
        %v2127 = vor.u32 %v2123, %v2126
        %v2128 = vrot.slane %v2127, 4
        %v2130 = vshll.u32 %v1969, 16
        %v2132 = vrot.slane %v2130, 5
        %v2133 = vsel %vm332, %v2128, %v2132
        %v2135 = vshrl.u32 %v1970, 16
        %v2137 = vrot.slane %v2135, 4
        %v2138 = vshll.u32 %v1970, 16
        %v2140 = vrot.slane %v2138, 5
        %v2141 = vor.u32 %v2137, %v2140
        %v2142 = vrot.slane %v2141, 4
        %v2144 = vshll.u32 %v1971, 16
        %v2146 = vrot.slane %v2144, 5
        %v2147 = vsel %vm332, %v2142, %v2146
        %v2149 = vshrl.u32 %v1972, 16
        %v2151 = vrot.slane %v2149, 4
        %v2152 = vshll.u32 %v1972, 16
        %v2154 = vrot.slane %v2152, 5
        %v2155 = vor.u32 %v2151, %v2154
        %v2156 = vrot.slane %v2155, 4
        %v2158 = vshll.u32 %v1973, 16
        %v2160 = vrot.slane %v2158, 5
        %v2161 = vsel %vm332, %v2156, %v2160
        %v2163 = vshrl.u32 %v1974, 16
        %v2165 = vrot.slane %v2163, 4
        %v2166 = vshll.u32 %v1974, 16
        %v2168 = vrot.slane %v2166, 5
        %v2169 = vor.u32 %v2165, %v2168
        %v2170 = vrot.slane %v2169, 4
        %v2172 = vshll.u32 %v1975, 16
        %v2174 = vrot.slane %v2172, 5
        %v2175 = vsel %vm332, %v2170, %v2174
        %v2177 = vshrl.u32 %v1976, 16
        %v2179 = vrot.slane %v2177, 4
        %v2180 = vshll.u32 %v1976, 16
        %v2182 = vrot.slane %v2180, 5
        %v2183 = vor.u32 %v2179, %v2182
        %v2184 = vrot.slane %v2183, 4
        %v2186 = vshll.u32 %v1977, 16
        %v2188 = vrot.slane %v2186, 5
        %v2189 = vsel %vm332, %v2184, %v2188
        %v2191 = vshrl.u32 %v1978, 16
        %v2193 = vrot.slane %v2191, 4
        %v2194 = vshll.u32 %v1978, 16
        %v2196 = vrot.slane %v2194, 5
        %v2197 = vor.u32 %v2193, %v2196
        %v2198 = vrot.slane %v2197, 4
        %v2200 = vshll.u32 %v1979, 16
        %v2202 = vrot.slane %v2200, 5
        %v2203 = vsel %vm332, %v2198, %v2202
        %v2220 = vunpack.c.l.bf16 %v1993
        %v2221 = vunpack.c.l.bf16 %v2007
        %v2222 = vunpack.c.l.bf16 %v2021
        %v2223 = vunpack.c.l.bf16 %v2035
        %v2224 = vunpack.c.l.bf16 %v2049
        %v2225 = vunpack.c.l.bf16 %v2063
        %v2226 = vunpack.c.l.bf16 %v2077
        %v2227 = vunpack.c.l.bf16 %v2091
        %v2228 = vunpack.c.l.bf16 %v2105
        %v2229 = vunpack.c.l.bf16 %v2119
        %v2230 = vunpack.c.l.bf16 %v2133
        %v2231 = vunpack.c.l.bf16 %v2147
        %v2232 = vunpack.c.l.bf16 %v2161
        %v2233 = vunpack.c.l.bf16 %v2175
        %v2234 = vunpack.c.l.bf16 %v2189
        %v2235 = vunpack.c.l.bf16 %v2203
        %s2236 = scalar_lea.vmem %s1, 7
        %v2237 = vld [vmem:[%s2236] sm:$0x1]
        %v2238 = vunpack.c.l.bf16 %v2237
        %2240 = vset.pattern.permute.xlu0 0
        %2241 = vperm.xlu0 %2240, %v2220
        %v2242 = vpop.permute.xlu0 %2241
        %2245 = vset.pattern.permute.xlu0 0
        %2246 = vperm.xlu0 %2245, %v2221
        %v2247 = vpop.permute.xlu0 %2246
        %2250 = vset.pattern.permute.xlu0 0
        %2251 = vperm.xlu0 %2250, %v2222
        %v2252 = vpop.permute.xlu0 %2251
        %2255 = vset.pattern.permute.xlu0 0
        %2256 = vperm.xlu0 %2255, %v2223
        %v2257 = vpop.permute.xlu0 %2256
        %2260 = vset.pattern.permute.xlu0 0
        %2261 = vperm.xlu0 %2260, %v2224
        %v2262 = vpop.permute.xlu0 %2261
        %2265 = vset.pattern.permute.xlu0 0
        %2266 = vperm.xlu0 %2265, %v2225
        %v2267 = vpop.permute.xlu0 %2266
        %2270 = vset.pattern.permute.xlu0 0
        %2271 = vperm.xlu0 %2270, %v2226
        %v2272 = vpop.permute.xlu0 %2271
        %2275 = vset.pattern.permute.xlu0 0
        %2276 = vperm.xlu0 %2275, %v2227
        %v2277 = vpop.permute.xlu0 %2276
        %2280 = vset.pattern.permute.xlu0 0
        %2281 = vperm.xlu0 %2280, %v2228
        %v2282 = vpop.permute.xlu0 %2281
        %2285 = vset.pattern.permute.xlu0 0
        %2286 = vperm.xlu0 %2285, %v2229
        %v2287 = vpop.permute.xlu0 %2286
        %2290 = vset.pattern.permute.xlu0 0
        %2291 = vperm.xlu0 %2290, %v2230
        %v2292 = vpop.permute.xlu0 %2291
        %2295 = vset.pattern.permute.xlu0 0
        %2296 = vperm.xlu0 %2295, %v2231
        %v2297 = vpop.permute.xlu0 %2296
        %2300 = vset.pattern.permute.xlu0 0
        %2301 = vperm.xlu0 %2300, %v2232
        %v2302 = vpop.permute.xlu0 %2301
        %2305 = vset.pattern.permute.xlu0 0
        %2306 = vperm.xlu0 %2305, %v2233
        %v2307 = vpop.permute.xlu0 %2306
        %2310 = vset.pattern.permute.xlu0 0
        %2311 = vperm.xlu0 %2310, %v2234
        %v2312 = vpop.permute.xlu0 %2311
        %2315 = vset.pattern.permute.xlu0 0
        %2316 = vperm.xlu0 %2315, %v2235
        %v2317 = vpop.permute.xlu0 %2316
        %v2319 = vlaneseq
        %v2320 = vshrl.u32 %v2319, 7
        %v2321 = vsub.s32 0, %v2320
        %v2322 = vrot.slane %v2238, %v2321
        %v2323 = vmul.f32 %v2242, %v2322
        %v2324 = vmul.f32 %v2247, %v2322
        %v2325 = vmul.f32 %v2252, %v2322
        %v2326 = vmul.f32 %v2257, %v2322
        %v2327 = vmul.f32 %v2262, %v2322
        %v2328 = vmul.f32 %v2267, %v2322
        %v2329 = vmul.f32 %v2272, %v2322
        %v2330 = vmul.f32 %v2277, %v2322
        %v2331 = vmul.f32 %v2282, %v2322
        %v2332 = vmul.f32 %v2287, %v2322
        %v2333 = vmul.f32 %v2292, %v2322
        %v2334 = vmul.f32 %v2297, %v2322
        %v2335 = vmul.f32 %v2302, %v2322
        %v2336 = vmul.f32 %v2307, %v2322
        %v2337 = vmul.f32 %v2312, %v2322
        %v2338 = vmul.f32 %v2317, %v2322
        %v2339 = vadd.f32 %v1932, %v2323
        %v2340 = vadd.f32 %v1933, %v2324
        %v2341 = vadd.f32 %v1934, %v2325
        %v2342 = vadd.f32 %v1935, %v2326
        %v2343 = vadd.f32 %v1936, %v2327
        %v2344 = vadd.f32 %v1937, %v2328
        %v2345 = vadd.f32 %v1938, %v2329
        %v2346 = vadd.f32 %v1939, %v2330
        %v2347 = vadd.f32 %v1940, %v2331
        %v2348 = vadd.f32 %v1941, %v2332
        %v2349 = vadd.f32 %v1942, %v2333
        %v2350 = vadd.f32 %v1943, %v2334
        %v2351 = vadd.f32 %v1944, %v2335
        %v2352 = vadd.f32 %v1945, %v2336
        %v2353 = vadd.f32 %v1946, %v2337
        %v2354 = vadd.f32 %v1947, %v2338
        %v2355 = vld [vmem:[%s1796] sm:$0xe]
        %v2356 = vld [vmem:[%s1796 + $0x8] sm:$0xe]
        %v2357 = vld [vmem:[%s1796 + $0x10] sm:$0xe]
        %v2358 = vld [vmem:[%s1796 + $0x18] sm:$0xe]
        %v2359 = vld [vmem:[%s1796 + $0x20] sm:$0xe]
        %v2360 = vld [vmem:[%s1796 + $0x28] sm:$0xe]
        %v2361 = vld [vmem:[%s1796 + $0x30] sm:$0xe]
        %v2362 = vld [vmem:[%s1796 + $0x38] sm:$0xe]
        %v2363 = vld [vmem:[%s1796 + $0x50] sm:$0xe]
        %v2364 = vld [vmem:[%s1796 + $0x58] sm:$0xe]
        %v2365 = vld [vmem:[%s1796 + $0x60] sm:$0xe]
        %v2366 = vld [vmem:[%s1796 + $0x68] sm:$0xe]
        %v2367 = vld [vmem:[%s1796 + $0x70] sm:$0xe]
        %v2368 = vld [vmem:[%s1796 + $0x78] sm:$0xe]
        %v2369 = vld [vmem:[%s1796 + $0x80] sm:$0xe]
        %v2370 = vld [vmem:[%s1796 + $0x88] sm:$0xe]
        %v2403 = vrot.slane %v2355, 5
        %v2404 = vrot.slane %v2403, 4
        %v2405 = vrot.slane %v1949, 5
        %v2406 = vsel %vm758, %v2404, %v2405
        %v2407 = vrot.slane %v2356, 5
        %v2408 = vrot.slane %v2407, 4
        %v2409 = vrot.slane %v1951, 5
        %v2410 = vsel %vm758, %v2408, %v2409
        %v2411 = vrot.slane %v2357, 5
        %v2412 = vrot.slane %v2411, 4
        %v2413 = vrot.slane %v1953, 5
        %v2414 = vsel %vm758, %v2412, %v2413
        %v2415 = vrot.slane %v2358, 5
        %v2416 = vrot.slane %v2415, 4
        %v2417 = vrot.slane %v1955, 5
        %v2418 = vsel %vm758, %v2416, %v2417
        %v2419 = vrot.slane %v2359, 5
        %v2420 = vrot.slane %v2419, 4
        %v2421 = vrot.slane %v1957, 5
        %v2422 = vsel %vm758, %v2420, %v2421
        %v2423 = vrot.slane %v2360, 5
        %v2424 = vrot.slane %v2423, 4
        %v2425 = vrot.slane %v1959, 5
        %v2426 = vsel %vm758, %v2424, %v2425
        %v2427 = vrot.slane %v2361, 5
        %v2428 = vrot.slane %v2427, 4
        %v2429 = vrot.slane %v1961, 5
        %v2430 = vsel %vm758, %v2428, %v2429
        %v2431 = vrot.slane %v2362, 5
        %v2432 = vrot.slane %v2431, 4
        %v2433 = vrot.slane %v1963, 5
        %v2434 = vsel %vm758, %v2432, %v2433
        %v2435 = vrot.slane %v2363, 5
        %v2436 = vrot.slane %v2435, 4
        %v2437 = vrot.slane %v1965, 5
        %v2438 = vsel %vm758, %v2436, %v2437
        %v2439 = vrot.slane %v2364, 5
        %v2440 = vrot.slane %v2439, 4
        %v2441 = vrot.slane %v1967, 5
        %v2442 = vsel %vm758, %v2440, %v2441
        %v2443 = vrot.slane %v2365, 5
        %v2444 = vrot.slane %v2443, 4
        %v2445 = vrot.slane %v1969, 5
        %v2446 = vsel %vm758, %v2444, %v2445
        %v2447 = vrot.slane %v2366, 5
        %v2448 = vrot.slane %v2447, 4
        %v2449 = vrot.slane %v1971, 5
        %v2450 = vsel %vm758, %v2448, %v2449
        %v2451 = vrot.slane %v2367, 5
        %v2452 = vrot.slane %v2451, 4
        %v2453 = vrot.slane %v1973, 5
        %v2454 = vsel %vm758, %v2452, %v2453
        %v2455 = vrot.slane %v2368, 5
        %v2456 = vrot.slane %v2455, 4
        %v2457 = vrot.slane %v1975, 5
        %v2458 = vsel %vm758, %v2456, %v2457
        %v2459 = vrot.slane %v2369, 5
        %v2460 = vrot.slane %v2459, 4
        %v2461 = vrot.slane %v1977, 5
        %v2462 = vsel %vm758, %v2460, %v2461
        %v2463 = vrot.slane %v2370, 5
        %v2464 = vrot.slane %v2463, 4
        %v2465 = vrot.slane %v1979, 5
        %v2466 = vsel %vm758, %v2464, %v2465
        %v2483 = vunpack.c.l.bf16 %v2406
        %v2484 = vunpack.c.l.bf16 %v2410
        %v2485 = vunpack.c.l.bf16 %v2414
        %v2486 = vunpack.c.l.bf16 %v2418
        %v2487 = vunpack.c.l.bf16 %v2422
        %v2488 = vunpack.c.l.bf16 %v2426
        %v2489 = vunpack.c.l.bf16 %v2430
        %v2490 = vunpack.c.l.bf16 %v2434
        %v2491 = vunpack.c.l.bf16 %v2438
        %v2492 = vunpack.c.l.bf16 %v2442
        %v2493 = vunpack.c.l.bf16 %v2446
        %v2494 = vunpack.c.l.bf16 %v2450
        %v2495 = vunpack.c.l.bf16 %v2454
        %v2496 = vunpack.c.l.bf16 %v2458
        %v2497 = vunpack.c.l.bf16 %v2462
        %v2498 = vunpack.c.l.bf16 %v2466
        %s2499 = scalar_lea.vmem %s1, 8
        %v2500 = vld [vmem:[%s2499] sm:$0x1]
        %v2501 = vunpack.c.l.bf16 %v2500
        %2503 = vset.pattern.permute.xlu0 0
        %2504 = vperm.xlu0 %2503, %v2483
        %v2505 = vpop.permute.xlu0 %2504
        %2508 = vset.pattern.permute.xlu0 0
        %2509 = vperm.xlu0 %2508, %v2484
        %v2510 = vpop.permute.xlu0 %2509
        %2513 = vset.pattern.permute.xlu0 0
        %2514 = vperm.xlu0 %2513, %v2485
        %v2515 = vpop.permute.xlu0 %2514
        %2518 = vset.pattern.permute.xlu0 0
        %2519 = vperm.xlu0 %2518, %v2486
        %v2520 = vpop.permute.xlu0 %2519
        %2523 = vset.pattern.permute.xlu0 0
        %2524 = vperm.xlu0 %2523, %v2487
        %v2525 = vpop.permute.xlu0 %2524
        %2528 = vset.pattern.permute.xlu0 0
        %2529 = vperm.xlu0 %2528, %v2488
        %v2530 = vpop.permute.xlu0 %2529
        %2533 = vset.pattern.permute.xlu0 0
        %2534 = vperm.xlu0 %2533, %v2489
        %v2535 = vpop.permute.xlu0 %2534
        %2538 = vset.pattern.permute.xlu0 0
        %2539 = vperm.xlu0 %2538, %v2490
        %v2540 = vpop.permute.xlu0 %2539
        %2543 = vset.pattern.permute.xlu0 0
        %2544 = vperm.xlu0 %2543, %v2491
        %v2545 = vpop.permute.xlu0 %2544
        %2548 = vset.pattern.permute.xlu0 0
        %2549 = vperm.xlu0 %2548, %v2492
        %v2550 = vpop.permute.xlu0 %2549
        %2553 = vset.pattern.permute.xlu0 0
        %2554 = vperm.xlu0 %2553, %v2493
        %v2555 = vpop.permute.xlu0 %2554
        %2558 = vset.pattern.permute.xlu0 0
        %2559 = vperm.xlu0 %2558, %v2494
        %v2560 = vpop.permute.xlu0 %2559
        %2563 = vset.pattern.permute.xlu0 0
        %2564 = vperm.xlu0 %2563, %v2495
        %v2565 = vpop.permute.xlu0 %2564
        %2568 = vset.pattern.permute.xlu0 0
        %2569 = vperm.xlu0 %2568, %v2496
        %v2570 = vpop.permute.xlu0 %2569
        %2573 = vset.pattern.permute.xlu0 0
        %2574 = vperm.xlu0 %2573, %v2497
        %v2575 = vpop.permute.xlu0 %2574
        %2578 = vset.pattern.permute.xlu0 0
        %2579 = vperm.xlu0 %2578, %v2498
        %v2580 = vpop.permute.xlu0 %2579
        %v2582 = vlaneseq
        %v2583 = vshrl.u32 %v2582, 7
        %v2584 = vsub.s32 0, %v2583
        %v2585 = vrot.slane %v2501, %v2584
        %v2586 = vmul.f32 %v2505, %v2585
        %v2587 = vmul.f32 %v2510, %v2585
        %v2588 = vmul.f32 %v2515, %v2585
        %v2589 = vmul.f32 %v2520, %v2585
        %v2590 = vmul.f32 %v2525, %v2585
        %v2591 = vmul.f32 %v2530, %v2585
        %v2592 = vmul.f32 %v2535, %v2585
        %v2593 = vmul.f32 %v2540, %v2585
        %v2594 = vmul.f32 %v2545, %v2585
        %v2595 = vmul.f32 %v2550, %v2585
        %v2596 = vmul.f32 %v2555, %v2585
        %v2597 = vmul.f32 %v2560, %v2585
        %v2598 = vmul.f32 %v2565, %v2585
        %v2599 = vmul.f32 %v2570, %v2585
        %v2600 = vmul.f32 %v2575, %v2585
        %v2601 = vmul.f32 %v2580, %v2585
        %v2602 = vadd.f32 %v2339, %v2586
        %v2603 = vadd.f32 %v2340, %v2587
        %v2604 = vadd.f32 %v2341, %v2588
        %v2605 = vadd.f32 %v2342, %v2589
        %v2606 = vadd.f32 %v2343, %v2590
        %v2607 = vadd.f32 %v2344, %v2591
        %v2608 = vadd.f32 %v2345, %v2592
        %v2609 = vadd.f32 %v2346, %v2593
        %v2610 = vadd.f32 %v2347, %v2594
        %v2611 = vadd.f32 %v2348, %v2595
        %v2612 = vadd.f32 %v2349, %v2596
        %v2613 = vadd.f32 %v2350, %v2597
        %v2614 = vadd.f32 %v2351, %v2598
        %v2615 = vadd.f32 %v2352, %v2599
        %v2616 = vadd.f32 %v2353, %v2600
        %v2617 = vadd.f32 %v2354, %v2601
        %vm2618 = vcmask 523264
        %2619 = vst.msk [vmem:[%s139] sm:$0xff] %vm2618, %v2602
        %2620 = vst.msk [vmem:[%s139 + $0x8] sm:$0xff] %vm2618, %v2603
        %2621 = vst.msk [vmem:[%s139 + $0x10] sm:$0xff] %vm2618, %v2604
        %2622 = vst.msk [vmem:[%s139 + $0x18] sm:$0xff] %vm2618, %v2605
        %2623 = vst.msk [vmem:[%s139 + $0x20] sm:$0xff] %vm2618, %v2606
        %2624 = vst.msk [vmem:[%s139 + $0x28] sm:$0xff] %vm2618, %v2607
        %2625 = vst.msk [vmem:[%s139 + $0x30] sm:$0xff] %vm2618, %v2608
        %2626 = vst.msk [vmem:[%s139 + $0x38] sm:$0xff] %vm2618, %v2609
        %2627 = vst.msk [vmem:[%s139 + $0x40] sm:$0xff] %vm2618, %v2610
        %2628 = vst.msk [vmem:[%s139 + $0x48] sm:$0xff] %vm2618, %v2611
        %2629 = vst.msk [vmem:[%s139 + $0x50] sm:$0xff] %vm2618, %v2612
        %2630 = vst.msk [vmem:[%s139 + $0x58] sm:$0xff] %vm2618, %v2613
        %2631 = vst.msk [vmem:[%s139 + $0x60] sm:$0xff] %vm2618, %v2614
        %2632 = vst.msk [vmem:[%s139 + $0x68] sm:$0xff] %vm2618, %v2615
        %2633 = vst.msk [vmem:[%s139 + $0x70] sm:$0xff] %vm2618, %v2616
        %2634 = vst.msk [vmem:[%s139 + $0x78] sm:$0xff] %vm2618, %v2617
        %s2635 = sand.u32 %s71, 1
        %s2636 = scalar_lea.sflag [#allocation3], %s2635
        %s2637 = sand.u32 %s71, 1
        %s2638 = smul.addr %s2637, 128
        %s2639 = scalar_lea.vmem [#allocation2], %s2638
        // Predicated region
        $region29: #{feature_head.1} parent=27 // pred_check
          %p2640 = pneg %p81
        $region30: #{feature_head.1} parent=27 // pred_check_branch
          %2642 = sbr.rel (%p2640) target = $region32
        $region31: #{feature_head.1} parent=27 // pred_region
          %s2643 = smul.u32 2, %s16
          %s2645 = ssub.s32 2048, 2048
          %2646 = vsyncadd %s2636, %s2645
          %s2647 = smul.addr %s2643, 8
          %s2648 = smul.addr %s2647, 128
          %s2649 = scalar_lea.hbm %s2, %s2648
          %s2650 = sshll.u32 %s2639, 4
          %s2651 = int_to_ptr.vmem [resolvable:$true] %s2650
          %2656 = dma.vmem_to_hbm [thread:$0]  %s2651, 2048, %s2649, %s2636, 128, 128, 8
        $region32: #{feature_head.1} parent=27 // pred_fallthru
          _
      $region28: #{feature_head.1} parent=5 // pred_fallthru
        _
      %p2657 = scmp.le.s32.totalorder 2, %s11
      // Predicated region
      $region33: #{feature_head.1} parent=5 // pred_check
        %p2658 = pneg %p2657
      $region34: #{feature_head.1} parent=5 // pred_check_branch
        %2660 = sbr.rel (%p2658) target = $region36
      $region35: #{feature_head.1} parent=5 // pred_region
        %s2661 = ssub.s32 %s11, 2
        // Predicated region
        $region37: #{feature_head.1} parent=35 // pred_check
          %p2662 = pneg %p87
        $region38: #{feature_head.1} parent=35 // pred_check_branch
          %2664 = sbr.rel (%p2662) target = $region40
        $region39: #{feature_head.1} parent=35 // pred_region
          %s2665 = sand.u32 %s72, 1
          %s2666 = scalar_lea.sflag [#allocation3], %s2665
          %s2667 = sand.u32 %s72, 1
          %s2668 = smul.addr %s2667, 128
          %s2669 = scalar_lea.vmem [#allocation2], %s2668
          %2670 = dma.done %s2666, 2048
        $region40: #{feature_head.1} parent=35 // pred_fallthru
          _
      $region36: #{feature_head.1} parent=5 // pred_fallthru
        _
    $region6: #{feature_head.1} parent=1 // loop_footer
      %s15 = sadd.s32 1, %s11
    $region7: #{feature_head.1} parent=1 // loop_footer_branch
      %10 = sbr.rel target = $region3
    $region8: #{feature_head.1} parent=1 // loop_exit
      _
    %2671 = vsyncpa [#allocation3], 1
    %s2672 = scalar_lea.sflag [#allocation3], 1
    %2673 = vsyncpa %s2672, 1

</llo_original>
